<compile_context>
chip_gen: v6e
topology: v6e:2x2x1
jax: 0.10.0
libtpu: 0.0.40
codegen_flags: <defaults>
</compile_context>

<pallas_src>
import functools

import jax
import jax.numpy as jnp
from jax import lax
from jax.experimental import pallas as pl
from jax.experimental.pallas import tpu as pltpu


def _round_up(x, m):
    return ((x + m - 1) // m) * m


def _supcon_tile_kernel(labr_ref, labc_ref, qf_ref, kf_ref, out_ref,
                        m_sc, l_sc, s_sc, p_sc, *,
                        inv_temp, loss_scale, n_valid, tq, tk):
    """One (row-tile, contrast-tile) step of the online-softmax SupCon loss.

    Per-anchor-row running state (VMEM scratch, reset at ki == 0):
      m_sc: running row max of logits (includes diagonal, excludes padding)
      l_sc: running sum exp(logits - m) over valid non-diagonal columns
      s_sc: running sum(mask * logits)   (max-free, so no online correction)
      p_sc: running sum(mask)            (== mask_pos_pairs)
    Finalize at ki == last:
      sum(mask*log_prob) = s - p*(m + log l);  loss_row = loss_scale * that / max(p, 1)
    """
    qi = pl.program_id(0)
    ki = pl.program_id(1)

    @pl.when(ki == 0)
    def _init():
        m_sc[...] = jnp.full_like(m_sc, -1e30)
        l_sc[...] = jnp.zeros_like(l_sc)
        s_sc[...] = jnp.zeros_like(s_sc)
        p_sc[...] = jnp.zeros_like(p_sc)

    # MXU: bf16 x bf16 -> f32 accumulation; 1/temperature applied once as an f32
    # scale of the accumulator tile (keeps full logit precision).
    adc = lax.dot_general(
        qf_ref[...], kf_ref[...], (((1,), (1,)), ((), ())),
        preferred_element_type=jnp.float32) * inv_temp          # [tq, tk] f32

    row_g = qi * tq + lax.broadcasted_iota(jnp.int32, (tq, tk), 0)
    col_g = ki * tk + lax.broadcasted_iota(jnp.int32, (tq, tk), 1)
    col_valid = col_g < n_valid          # mask out padded contrast columns
    not_diag = row_g != col_g            # self-contrast removal

    neg_big = -1e30
    adc_v = jnp.where(col_valid, adc, neg_big)       # row max includes diagonal
    m_prev = m_sc[...]
    m_new = jnp.maximum(m_prev, jnp.max(adc_v, axis=1, keepdims=True))

    adc_e = jnp.where(not_diag, adc_v, neg_big)      # exp-sum excludes diagonal
    alpha = jnp.exp(m_prev - m_new)
    l_sc[...] = alpha * l_sc[...] + jnp.sum(jnp.exp(adc_e - m_new),
                                            axis=1, keepdims=True)
    m_sc[...] = m_new

    # Positive-pair mask rebuilt in-kernel from tiled labels (no NxN mask in HBM).
    pos = jnp.where(
        (labr_ref[...] == labc_ref[...]) & not_diag & col_valid, 1.0, 0.0)
    s_sc[...] += jnp.sum(pos * adc, axis=1, keepdims=True)
    p_sc[...] += jnp.sum(pos, axis=1, keepdims=True)

    @pl.when(ki == pl.num_programs(1) - 1)
    def _finalize():
        logsumexp = m_sc[...] + jnp.log(l_sc[...])
        p = p_sc[...]
        denom = jnp.where(p < 1e-6, 1.0, p)          # tiny (tq,1) vector: exact div
        mean_log_prob_pos = (s_sc[...] - p * logsumexp) / denom
        row_ids = qi * tq + lax.broadcasted_iota(jnp.int32, (tq, 1), 0)
        out_ref[...] = jnp.where(row_ids < n_valid,
                                 loss_scale * mean_log_prob_pos, 0.0)


def supcon_loss(features, labels=None, mask=None, *, temperature=0.07,
                contrast_mode='all', base_temperature=0.07):
    """JAX/Pallas equivalent of SupConLoss.forward (contrast_mode='all')."""
    features = jnp.asarray(features)
    if features.ndim < 3:
        raise ValueError('`features` needs to be [bsz, n_views, ...]')
    if features.ndim > 3:
        features = features.reshape(features.shape[0], features.shape[1], -1)
    bsz, n_views, dim = features.shape

    if labels is not None and mask is not None:
        raise ValueError('Cannot define both `labels` and `mask`')
    if mask is not None:
        # TODO(synk): explicit (possibly asymmetric) [bsz, bsz] mask is not wired
        # into the tiled kernel (it rebuilds the mask from labels in-kernel).
        raise NotImplementedError('explicit `mask` is not supported by the Pallas kernel')
    if labels is None:
        key = jnp.arange(bsz, dtype=jnp.int32)     # eye(bsz) == unique label per sample
    else:
        labels = jnp.asarray(labels).reshape(-1)
        if labels.shape[0] != bsz:
            raise ValueError('Num of labels does not match num of features')
        key = labels.astype(jnp.int32)
    if contrast_mode != 'all':
        # TODO(synk): contrast_mode='one' (anchor = view 0 only) not implemented.
        raise NotImplementedError("Only contrast_mode='all' is implemented")

    n = n_views * bsz
    # view-major concat == torch.cat(torch.unbind(features, dim=1), dim=0)
    contrast_feature = jnp.transpose(features, (1, 0, 2)).reshape(n, dim)

    # ---- padding & tile selection (sublane/lane aligned, VMEM-friendly) --------
    n_pad = _round_up(max(n, 128), 128)
    tq = 256 if n_pad % 256 == 0 else 128            # anchor-row tile (mult of 8)
    if n_pad % 512 == 0:
        tk = 512                                     # contrast tile (mult of 128)
    elif n_pad % 256 == 0:
        tk = 256
    else:
        tk = 128
    d_pad = _round_up(max(dim, 128), 128)            # MXU contraction dim -> x128

    feat = jnp.zeros((n_pad, d_pad), jnp.bfloat16)
    feat = feat.at[:n, :dim].set(contrast_feature.astype(jnp.bfloat16))

    lab_full = jnp.tile(key, n_views)                                   # [n]
    lab_pad = jnp.full((n_pad,), -1, jnp.int32).at[:n].set(lab_full)
    lab_rows = lab_pad.reshape(n_pad, 1)
    lab_cols = lab_pad.reshape(1, n_pad)

    kernel = functools.partial(
        _supcon_tile_kernel,
        inv_temp=float(1.0 / temperature),
        loss_scale=float(-(temperature / base_temperature)),
        n_valid=n, tq=tq, tk=tk)

    per_row = pl.pallas_call(
        kernel,
        out_shape=jax.ShapeDtypeStruct((n_pad, 1), jnp.float32),
        grid=(n_pad // tq, n_pad // tk),             # reduction (contrast) axis last
        in_specs=[
            pl.BlockSpec((tq, 1), lambda qi, ki: (qi, 0)),       # anchor-row labels
            pl.BlockSpec((1, tk), lambda qi, ki: (0, ki)),       # contrast-col labels
            pl.BlockSpec((tq, d_pad), lambda qi, ki: (qi, 0)),   # anchor feature tile
            pl.BlockSpec((tk, d_pad), lambda qi, ki: (ki, 0)),   # contrast feature tile
        ],
        out_specs=pl.BlockSpec((tq, 1), lambda qi, ki: (qi, 0)),
        scratch_shapes=[pltpu.VMEM((tq, 1), jnp.float32)] * 4,   # m, l, s, p
        compiler_params=pltpu.CompilerParams(
            dimension_semantics=("parallel", "arbitrary")),
    )(lab_rows, lab_cols, feat, feat)

    # loss.view(anchor_count, batch_size).mean() == mean over all n anchors
    return jnp.sum(per_row) / float(n)


def supcon_loss_ref(features, labels=None, *, temperature=0.07,
                    base_temperature=0.07, matmul_dtype=jnp.float32):
    """Pure-JAX reference (mirrors the PyTorch code, contrast_mode='all')."""
    bsz, n_views, dim = features.shape
    if labels is None:
        base_mask = jnp.eye(bsz, dtype=jnp.float32)
    else:
        labels = jnp.asarray(labels).reshape(-1, 1)
        base_mask = (labels == labels.T).astype(jnp.float32)
    contrast_feature = jnp.transpose(features, (1, 0, 2)).reshape(n_views * bsz, dim)
    f = contrast_feature.astype(matmul_dtype)
    adc = jnp.dot(f, f.T, preferred_element_type=jnp.float32).astype(jnp.float32)
    adc = adc / temperature
    logits = adc - jnp.max(adc, axis=1, keepdims=True)
    n = n_views * bsz
    mask = jnp.tile(base_mask, (n_views, n_views))
    logits_mask = 1.0 - jnp.eye(n, dtype=jnp.float32)
    mask = mask * logits_mask
    exp_logits = jnp.exp(logits) * logits_mask
    log_prob = logits - jnp.log(exp_logits.sum(1, keepdims=True))
    mask_pos_pairs = mask.sum(1)
    mask_pos_pairs = jnp.where(mask_pos_pairs < 1e-6, 1.0, mask_pos_pairs)
    mean_log_prob_pos = (mask * log_prob).sum(1) / mask_pos_pairs
    loss = -(temperature / base_temperature) * mean_log_prob_pos
    return loss.reshape(n_views, bsz).mean()


if __name__ == "__main__":
    root = jax.random.PRNGKey(0)
    kf, kl, kf2 = jax.random.split(root, 3)

    # Test 1: small supervised case (bsz=8, n_views=2, dim=32) -> single-tile grid.
    bsz, n_views, dim = 8, 2, 32
    features = jax.random.normal(kf, (bsz, n_views, dim), dtype=jnp.float32)
    features = features / jnp.linalg.norm(features, axis=-1, keepdims=True)
    labels = jax.random.randint(kl, (bsz,), 0, 3)

    loss = jax.block_until_ready(supcon_loss(features, labels=labels))
    ref_bf16 = supcon_loss_ref(features, labels=labels, matmul_dtype=jnp.bfloat16)
    ref_f32 = supcon_loss_ref(features, labels=labels)
    assert jnp.allclose(loss, ref_bf16, atol=2e-4, rtol=2e-4), (loss, ref_bf16)
    assert jnp.allclose(loss, ref_f32, atol=5e-2, rtol=5e-2), (loss, ref_f32)

    # Test 2: SimCLR (labels=None) with non-aligned N=320 and D=40 -> exercises
    # the multi-tile online-softmax path (grid 3x3) plus N/D zero-padding.
    bsz2, n_views2, dim2 = 160, 2, 40
    features2 = jax.random.normal(kf2, (bsz2, n_views2, dim2), dtype=jnp.float32)
    features2 = features2 / jnp.linalg.norm(features2, axis=-1, keepdims=True)

    loss2 = jax.block_until_ready(supcon_loss(features2))
    ref2_bf16 = supcon_loss_ref(features2, matmul_dtype=jnp.bfloat16)
    ref2_f32 = supcon_loss_ref(features2)
    assert jnp.allclose(loss2, ref2_bf16, atol=2e-4, rtol=2e-4), (loss2, ref2_bf16)
    assert jnp.allclose(loss2, ref2_f32, atol=5e-2, rtol=5e-2), (loss2, ref2_f32)

    print("KERNEL_OK")
</pallas_src>

<mosaic_0001>
module attributes {stable_mosaic.version = 11 : i64} {
  func.func @_supcon_tile_kernel(%arg0: i32, %arg1: i32, %arg2: memref<128x1xi32, #tpu.memory_space<vmem>>, %arg3: memref<1x128xi32, #tpu.memory_space<vmem>>, %arg4: memref<128x128xbf16, #tpu.memory_space<vmem>>, %arg5: memref<128x128xbf16, #tpu.memory_space<vmem>>, %arg6: memref<128x1xf32, #tpu.memory_space<vmem>>, %arg7: memref<128x1xf32, #tpu.memory_space<vmem>>, %arg8: memref<128x1xf32, #tpu.memory_space<vmem>>, %arg9: memref<128x1xf32, #tpu.memory_space<vmem>>, %arg10: memref<128x1xf32, #tpu.memory_space<vmem>>) attributes {dimension_semantics = [#tpu.dimension_semantics<parallel>, #tpu.dimension_semantics<arbitrary>], iteration_bounds = array<i64: 1, 1>, scalar_prefetch = 0 : i64, scratch_operands = 4 : i64, tpu.core_type = #tpu.core_type<tc>, window_params = [{transform_indices = @transform_0, window_bounds = array<i64: 128, 1>}, {transform_indices = @transform_1, window_bounds = array<i64: 1, 128>}, {transform_indices = @transform_2, window_bounds = array<i64: 128, 128>}, {transform_indices = @transform_3, window_bounds = array<i64: 128, 128>}, {transform_indices = @transform_4, window_bounds = array<i64: 128, 1>}]} {
    %c0_i32 = arith.constant 0 : i32
    %0 = arith.cmpi eq, %arg1, %c0_i32 : i32
    %1 = arith.extui %0 : i1 to i32
    %c0_i32_0 = arith.constant 0 : i32
    %2 = arith.cmpi ne, %1, %c0_i32_0 : i32
    scf.if %2 {
      %cst_36 = arith.constant -1.000000e+30 : f32
      %63 = vector.broadcast %cst_36 : f32 to vector<128x1xf32>
      %c0_37 = arith.constant 0 : index
      %c0_38 = arith.constant 0 : index
      %64 = vector.load %arg7[%c0_37, %c0_38] : memref<128x1xf32, #tpu.memory_space<vmem>>, vector<128x1xf32>
      tpu.vector_store %arg7[%c0_37, %c0_38], %63 {strides = array<i32>} : memref<128x1xf32, #tpu.memory_space<vmem>>, vector<128x1xf32>,
      %cst_39 = arith.constant 0.000000e+00 : f32
      %65 = vector.broadcast %cst_39 : f32 to vector<128x1xf32>
      %c0_40 = arith.constant 0 : index
      %c0_41 = arith.constant 0 : index
      %66 = vector.load %arg8[%c0_40, %c0_41] : memref<128x1xf32, #tpu.memory_space<vmem>>, vector<128x1xf32>
      tpu.vector_store %arg8[%c0_40, %c0_41], %65 {strides = array<i32>} : memref<128x1xf32, #tpu.memory_space<vmem>>, vector<128x1xf32>,
      %cst_42 = arith.constant 0.000000e+00 : f32
      %67 = vector.broadcast %cst_42 : f32 to vector<128x1xf32>
      %c0_43 = arith.constant 0 : index
      %c0_44 = arith.constant 0 : index
      %68 = vector.load %arg9[%c0_43, %c0_44] : memref<128x1xf32, #tpu.memory_space<vmem>>, vector<128x1xf32>
      tpu.vector_store %arg9[%c0_43, %c0_44], %67 {strides = array<i32>} : memref<128x1xf32, #tpu.memory_space<vmem>>, vector<128x1xf32>,
      %cst_45 = arith.constant 0.000000e+00 : f32
      %69 = vector.broadcast %cst_45 : f32 to vector<128x1xf32>
      %c0_46 = arith.constant 0 : index
      %c0_47 = arith.constant 0 : index
      %70 = vector.load %arg10[%c0_46, %c0_47] : memref<128x1xf32, #tpu.memory_space<vmem>>, vector<128x1xf32>
      tpu.vector_store %arg10[%c0_46, %c0_47], %69 {strides = array<i32>} : memref<128x1xf32, #tpu.memory_space<vmem>>, vector<128x1xf32>,
    } else {
    }
    %c0 = arith.constant 0 : index
    %c0_1 = arith.constant 0 : index
    %3 = vector.load %arg4[%c0, %c0_1] : memref<128x128xbf16, #tpu.memory_space<vmem>>, vector<128x128xbf16>
    %c0_2 = arith.constant 0 : index
    %c0_3 = arith.constant 0 : index
    %4 = vector.load %arg5[%c0_2, %c0_3] : memref<128x128xbf16, #tpu.memory_space<vmem>>, vector<128x128xbf16>
    %cst = arith.constant dense<0.000000e+00> : vector<128x128xf32>
    %5 = tpu.matmul %3, %4, %cst {dimension_numbers = #tpu.dot_dimension_numbers<[1], [1], [0], [0], [0, 0, 1, 0], [], []>} : vector<128x128xbf16>, vector<128x128xbf16>, vector<128x128xf32> -> vector<128x128xf32>
    %cst_4 = arith.constant 14.2857141 : f32
    %6 = vector.broadcast %cst_4 : f32 to vector<128x128xf32>
    %7 = arith.mulf %5, %6 : vector<128x128xf32>
    %c128_i32 = arith.constant 128 : i32
    %8 = arith.muli %arg0, %c128_i32 : i32
    %9 = tpu.iota {dimensions = array<i32: 0>} : vector<128x128xi32>
    %10 = vector.broadcast %8 : i32 to vector<128x128xi32>
    %11 = arith.addi %10, %9 : vector<128x128xi32>
    %c128_i32_5 = arith.constant 128 : i32
    %12 = arith.muli %arg1, %c128_i32_5 : i32
    %13 = tpu.iota {dimensions = array<i32: 1>} : vector<128x128xi32>
    %14 = vector.broadcast %12 : i32 to vector<128x128xi32>
    %15 = arith.addi %14, %13 : vector<128x128xi32>
    %c16_i32 = arith.constant 16 : i32
    %16 = vector.broadcast %c16_i32 : i32 to vector<128x128xi32>
    %17 = arith.cmpi slt, %15, %16 : vector<128x128xi32>
    %18 = arith.cmpi ne, %11, %15 : vector<128x128xi32>
    %cst_6 = arith.constant -1.000000e+30 : f32
    %19 = vector.broadcast %cst_6 : f32 to vector<128x128xf32>
    %20 = arith.select %17, %7, %19 : vector<128x128xi1>, vector<128x128xf32>
    %c0_7 = arith.constant 0 : index
    %c0_8 = arith.constant 0 : index
    %21 = vector.load %arg7[%c0_7, %c0_8] : memref<128x1xf32, #tpu.memory_space<vmem>>, vector<128x1xf32>
    %cst_9 = arith.constant dense<0xFF800000> : vector<128xf32>
    %22 = vector.multi_reduction <maximumf>, %20, %cst_9 [1] : vector<128x128xf32> to vector<128xf32>
    %23 = vector.shape_cast %22 : vector<128xf32> to vector<128x1xf32>
    %24 = arith.maximumf %21, %23 : vector<128x1xf32>
    %cst_10 = arith.constant -1.000000e+30 : f32
    %25 = vector.broadcast %cst_10 : f32 to vector<128x128xf32>
    %26 = arith.select %18, %20, %25 : vector<128x128xi1>, vector<128x128xf32>
    %27 = arith.subf %21, %24 : vector<128x1xf32>
    %28 = math.exp %27 : vector<128x1xf32>
    %c0_11 = arith.constant 0 : index
    %c0_12 = arith.constant 0 : index
    %29 = vector.load %arg8[%c0_11, %c0_12] : memref<128x1xf32, #tpu.memory_space<vmem>>, vector<128x1xf32>
    %30 = arith.mulf %28, %29 : vector<128x1xf32>
    %31 = vector.broadcast %24 : vector<128x1xf32> to vector<128x128xf32>
    %32 = arith.subf %26, %31 : vector<128x128xf32>
    %33 = math.exp %32 : vector<128x128xf32>
    %cst_13 = arith.constant dense<0.000000e+00> : vector<128xf32>
    %34 = vector.multi_reduction <add>, %33, %cst_13 [1] : vector<128x128xf32> to vector<128xf32>
    %35 = vector.shape_cast %34 : vector<128xf32> to vector<128x1xf32>
    %36 = arith.addf %30, %35 : vector<128x1xf32>
    %c0_14 = arith.constant 0 : index
    %c0_15 = arith.constant 0 : index
    %37 = vector.load %arg8[%c0_14, %c0_15] : memref<128x1xf32, #tpu.memory_space<vmem>>, vector<128x1xf32>
    tpu.vector_store %arg8[%c0_14, %c0_15], %36 {strides = array<i32>} : memref<128x1xf32, #tpu.memory_space<vmem>>, vector<128x1xf32>,
    %c0_16 = arith.constant 0 : index
    %c0_17 = arith.constant 0 : index
    %38 = vector.load %arg7[%c0_16, %c0_17] : memref<128x1xf32, #tpu.memory_space<vmem>>, vector<128x1xf32>
    tpu.vector_store %arg7[%c0_16, %c0_17], %24 {strides = array<i32>} : memref<128x1xf32, #tpu.memory_space<vmem>>, vector<128x1xf32>,
    %c0_18 = arith.constant 0 : index
    %c0_19 = arith.constant 0 : index
    %39 = vector.load %arg2[%c0_18, %c0_19] : memref<128x1xi32, #tpu.memory_space<vmem>>, vector<128x1xi32>
    %c0_20 = arith.constant 0 : index
    %c0_21 = arith.constant 0 : index
    %40 = vector.load %arg3[%c0_20, %c0_21] : memref<1x128xi32, #tpu.memory_space<vmem>>, vector<1x128xi32>
    %41 = vector.broadcast %39 : vector<128x1xi32> to vector<128x128xi32>
    %42 = vector.broadcast %40 : vector<1x128xi32> to vector<128x128xi32>
    %43 = arith.cmpi eq, %41, %42 : vector<128x128xi32>
    %44 = arith.andi %43, %18 : vector<128x128xi1>
    %45 = arith.andi %44, %17 : vector<128x128xi1>
    %cst_22 = arith.constant 1.000000e+00 : f32
    %cst_23 = arith.constant 0.000000e+00 : f32
    %46 = vector.broadcast %cst_22 : f32 to vector<128x128xf32>
    %47 = vector.broadcast %cst_23 : f32 to vector<128x128xf32>
    %48 = arith.select %45, %46, %47 : vector<128x128xi1>, vector<128x128xf32>
    %c0_24 = arith.constant 0 : index
    %c0_25 = arith.constant 0 : index
    %49 = vector.load %arg9[%c0_24, %c0_25] : memref<128x1xf32, #tpu.memory_space<vmem>>, vector<128x1xf32>
    %50 = arith.mulf %48, %7 : vector<128x128xf32>
    %cst_26 = arith.constant dense<0.000000e+00> : vector<128xf32>
    %51 = vector.multi_reduction <add>, %50, %cst_26 [1] : vector<128x128xf32> to vector<128xf32>
    %52 = vector.shape_cast %51 : vector<128xf32> to vector<128x1xf32>
    %53 = arith.addf %49, %52 : vector<128x1xf32>
    %c0_27 = arith.constant 0 : index
    %c0_28 = arith.constant 0 : index
    %54 = vector.load %arg9[%c0_27, %c0_28] : memref<128x1xf32, #tpu.memory_space<vmem>>, vector<128x1xf32>
    tpu.vector_store %arg9[%c0_27, %c0_28], %53 {strides = array<i32>} : memref<128x1xf32, #tpu.memory_space<vmem>>, vector<128x1xf32>,
    %c0_29 = arith.constant 0 : index
    %c0_30 = arith.constant 0 : index
    %55 = vector.load %arg10[%c0_29, %c0_30] : memref<128x1xf32, #tpu.memory_space<vmem>>, vector<128x1xf32>
    %cst_31 = arith.constant dense<0.000000e+00> : vector<128xf32>
    %56 = vector.multi_reduction <add>, %48, %cst_31 [1] : vector<128x128xf32> to vector<128xf32>
    %57 = vector.shape_cast %56 : vector<128xf32> to vector<128x1xf32>
    %58 = arith.addf %55, %57 : vector<128x1xf32>
    %c0_32 = arith.constant 0 : index
    %c0_33 = arith.constant 0 : index
    %59 = vector.load %arg10[%c0_32, %c0_33] : memref<128x1xf32, #tpu.memory_space<vmem>>, vector<128x1xf32>
    tpu.vector_store %arg10[%c0_32, %c0_33], %58 {strides = array<i32>} : memref<128x1xf32, #tpu.memory_space<vmem>>, vector<128x1xf32>,
    %c0_i32_34 = arith.constant 0 : i32
    %60 = arith.cmpi eq, %arg1, %c0_i32_34 : i32
    %61 = arith.extui %60 : i1 to i32
    %c0_i32_35 = arith.constant 0 : i32
    %62 = arith.cmpi ne, %61, %c0_i32_35 : i32
    scf.if %62 {
      %c0_36 = arith.constant 0 : index
      %c0_37 = arith.constant 0 : index
      %63 = vector.load %arg7[%c0_36, %c0_37] : memref<128x1xf32, #tpu.memory_space<vmem>>, vector<128x1xf32>
      %c0_38 = arith.constant 0 : index
      %c0_39 = arith.constant 0 : index
      %64 = vector.load %arg8[%c0_38, %c0_39] : memref<128x1xf32, #tpu.memory_space<vmem>>, vector<128x1xf32>
      %65 = math.log %64 : vector<128x1xf32>
      %66 = arith.addf %63, %65 : vector<128x1xf32>
      %c0_40 = arith.constant 0 : index
      %c0_41 = arith.constant 0 : index
      %67 = vector.load %arg10[%c0_40, %c0_41] : memref<128x1xf32, #tpu.memory_space<vmem>>, vector<128x1xf32>
      %cst_42 = arith.constant 9.99999997E-7 : f32
      %68 = vector.broadcast %cst_42 : f32 to vector<128x1xf32>
      %69 = arith.cmpf olt, %67, %68 : vector<128x1xf32>
      %cst_43 = arith.constant 1.000000e+00 : f32
      %70 = vector.broadcast %cst_43 : f32 to vector<128x1xf32>
      %71 = arith.select %69, %70, %67 : vector<128x1xi1>, vector<128x1xf32>
      %c0_44 = arith.constant 0 : index
      %c0_45 = arith.constant 0 : index
      %72 = vector.load %arg9[%c0_44, %c0_45] : memref<128x1xf32, #tpu.memory_space<vmem>>, vector<128x1xf32>
      %73 = arith.mulf %67, %66 : vector<128x1xf32>
      %74 = arith.subf %72, %73 : vector<128x1xf32>
      %75 = arith.divf %74, %71 : vector<128x1xf32>
      %c128_i32_46 = arith.constant 128 : i32
      %76 = arith.muli %arg0, %c128_i32_46 : i32
      %77 = tpu.iota {dimensions = array<i32: 0>} : vector<128x1xi32>
      %78 = vector.broadcast %76 : i32 to vector<128x1xi32>
      %79 = arith.addi %78, %77 : vector<128x1xi32>
      %c16_i32_47 = arith.constant 16 : i32
      %80 = vector.broadcast %c16_i32_47 : i32 to vector<128x1xi32>
      %81 = arith.cmpi slt, %79, %80 : vector<128x1xi32>
      %cst_48 = arith.constant -1.000000e+00 : f32
      %82 = vector.broadcast %cst_48 : f32 to vector<128x1xf32>
      %83 = arith.mulf %82, %75 : vector<128x1xf32>
      %cst_49 = arith.constant 0.000000e+00 : f32
      %84 = vector.broadcast %cst_49 : f32 to vector<128x1xf32>
      %85 = arith.select %81, %83, %84 : vector<128x1xi1>, vector<128x1xf32>
      %c0_50 = arith.constant 0 : index
      %c0_51 = arith.constant 0 : index
      %86 = vector.load %arg6[%c0_50, %c0_51] : memref<128x1xf32, #tpu.memory_space<vmem>>, vector<128x1xf32>
      tpu.vector_store %arg6[%c0_50, %c0_51], %85 {strides = array<i32>} : memref<128x1xf32, #tpu.memory_space<vmem>>, vector<128x1xf32>,
    } else {
    }
    return
  }
  func.func @transform_0(%arg0: i32, %arg1: i32) -> (i32, i32) {
    %c0_i32 = arith.constant 0 : i32
    %c0_i32_0 = arith.constant 0 : i32
    return %arg0, %c0_i32 : i32, i32
  }
  func.func @transform_1(%arg0: i32, %arg1: i32) -> (i32, i32) {
    %c0_i32 = arith.constant 0 : i32
    %c0_i32_0 = arith.constant 0 : i32
    return %c0_i32, %arg1 : i32, i32
  }
  func.func @transform_2(%arg0: i32, %arg1: i32) -> (i32, i32) {
    %c0_i32 = arith.constant 0 : i32
    %c0_i32_0 = arith.constant 0 : i32
    return %arg0, %c0_i32 : i32, i32
  }
  func.func @transform_3(%arg0: i32, %arg1: i32) -> (i32, i32) {
    %c0_i32 = arith.constant 0 : i32
    %c0_i32_0 = arith.constant 0 : i32
    return %arg1, %c0_i32 : i32, i32
  }
  func.func @transform_4(%arg0: i32, %arg1: i32) -> (i32, i32) {
    %c0_i32 = arith.constant 0 : i32
    %c0_i32_0 = arith.constant 0 : i32
    return %arg0, %c0_i32 : i32, i32
  }
}

</mosaic_0001>

<llo_original>
// kernel: tpu_custom_call.1
$region0: #{tpu_custom_call.1}
  #allocation0 [shape = 'u32[]', space=smem, size = 0x4, offset = 0x4, fixed_abs, tag = 'smem constant byte address 0x4 - core index']
  #allocation1 [shape = 'u32[144,128]{1,0:T(1,128)}', space=vmem, size = 0x12000, scoped, tag = 'internal scratch']
  #allocation2 [shape = 'f32[128,1]{1,0:T(8,128)}', space=vmem, size = 0x10000, scoped, tag = 'scratch operand']
  #allocation3 [shape = 'f32[128,1]{1,0:T(8,128)}', space=vmem, size = 0x10000, scoped, tag = 'scratch operand']
  #allocation4 [shape = 'f32[128,1]{1,0:T(8,128)}', space=vmem, size = 0x10000, scoped, tag = 'scratch operand']
  #allocation5 [shape = 'f32[128,1]{1,0:T(8,128)}', space=vmem, size = 0x10000, scoped, tag = 'scratch operand']
  %s0 = inlined_call_operand.vmem [shape: s32[128,1], index: 0, kind: input, shape index: {}]
  %s1 = inlined_call_operand.vmem [shape: s32[1,128], index: 1, kind: input, shape index: {}]
  %s2 = inlined_call_operand.vmem [shape: bf16[128,128], index: 2, kind: input, shape index: {}]
  %s3 = inlined_call_operand.vmem [shape: bf16[128,128], index: 3, kind: input, shape index: {}]
  %s4 = inlined_call_operand.vmem [shape: f32[128,1], index: 4, kind: output, shape index: {}]
  %s5 = sld [smem:[#allocation0]]
  $region34: #{tpu_custom_call.1} parent=0
    _
  %s7 = ssub.s32 1, %s5
  %s8 = scalar_select 0, %s7, %s5
  // Predicated region
  $region2: #{tpu_custom_call.1} parent=0 // pred_check
    _
  $region3: #{tpu_custom_call.1} parent=0 // pred_check_branch
    %10 = sbr.rel (0) target = $region5
  $region4: #{tpu_custom_call.1} parent=0 // pred_region
    _
  $region5: #{tpu_custom_call.1} parent=0 // pred_fallthru
    _
  // Predicated region
  $region6: #{tpu_custom_call.1} parent=0 // pred_check
    _
  $region7: #{tpu_custom_call.1} parent=0 // pred_check_branch
    %12 = sbr.rel (0) target = $region9
  $region8: #{tpu_custom_call.1} parent=0 // pred_region
    _
  $region9: #{tpu_custom_call.1} parent=0 // pred_fallthru
    _
  // Predicated region
  $region10: #{tpu_custom_call.1} parent=0 // pred_check
    _
  $region11: #{tpu_custom_call.1} parent=0 // pred_check_branch
    %14 = sbr.rel (0) target = $region13
  $region12: #{tpu_custom_call.1} parent=0 // pred_region
    _
  $region13: #{tpu_custom_call.1} parent=0 // pred_fallthru
    _
  // Predicated region
  $region14: #{tpu_custom_call.1} parent=0 // pred_check
    _
  $region15: #{tpu_custom_call.1} parent=0 // pred_check_branch
    %16 = sbr.rel (0) target = $region17
  $region16: #{tpu_custom_call.1} parent=0 // pred_region
    _
  $region17: #{tpu_custom_call.1} parent=0 // pred_fallthru
    _
  %p18 = scmp.eq.s32.totalorder 0, 0
  // Predicated region
  $region18: #{tpu_custom_call.1} parent=0 // pred_check
    %p19 = pneg %p18
  $region19: #{tpu_custom_call.1} parent=0 // pred_check_branch
    %21 = sbr.rel (%p19) target = $region21
  $region20: #{tpu_custom_call.1} parent=0 // pred_region
    %vm22 = vcmask 7168
    %23 = vst.msk [vmem:[#allocation2] sm:$0xff] %vm22, -1e+30
    %24 = vst.msk [vmem:[#allocation2 + $0x8] sm:$0xff] %vm22, -1e+30
    %25 = vst.msk [vmem:[#allocation2 + $0x10] sm:$0xff] %vm22, -1e+30
    %26 = vst.msk [vmem:[#allocation2 + $0x18] sm:$0xff] %vm22, -1e+30
    %27 = vst.msk [vmem:[#allocation2 + $0x20] sm:$0xff] %vm22, -1e+30
    %28 = vst.msk [vmem:[#allocation2 + $0x28] sm:$0xff] %vm22, -1e+30
    %29 = vst.msk [vmem:[#allocation2 + $0x30] sm:$0xff] %vm22, -1e+30
    %30 = vst.msk [vmem:[#allocation2 + $0x38] sm:$0xff] %vm22, -1e+30
    %31 = vst.msk [vmem:[#allocation2 + $0x40] sm:$0xff] %vm22, -1e+30
    %32 = vst.msk [vmem:[#allocation2 + $0x48] sm:$0xff] %vm22, -1e+30
    %33 = vst.msk [vmem:[#allocation2 + $0x50] sm:$0xff] %vm22, -1e+30
    %34 = vst.msk [vmem:[#allocation2 + $0x58] sm:$0xff] %vm22, -1e+30
    %35 = vst.msk [vmem:[#allocation2 + $0x60] sm:$0xff] %vm22, -1e+30
    %36 = vst.msk [vmem:[#allocation2 + $0x68] sm:$0xff] %vm22, -1e+30
    %37 = vst.msk [vmem:[#allocation2 + $0x70] sm:$0xff] %vm22, -1e+30
    %38 = vst.msk [vmem:[#allocation2 + $0x78] sm:$0xff] %vm22, -1e+30
    %39 = vst.msk [vmem:[#allocation3] sm:$0xff] %vm22, 0.0
    %40 = vst.msk [vmem:[#allocation3 + $0x8] sm:$0xff] %vm22, 0.0
    %41 = vst.msk [vmem:[#allocation3 + $0x10] sm:$0xff] %vm22, 0.0
    %42 = vst.msk [vmem:[#allocation3 + $0x18] sm:$0xff] %vm22, 0.0
    %43 = vst.msk [vmem:[#allocation3 + $0x20] sm:$0xff] %vm22, 0.0
    %44 = vst.msk [vmem:[#allocation3 + $0x28] sm:$0xff] %vm22, 0.0
    %45 = vst.msk [vmem:[#allocation3 + $0x30] sm:$0xff] %vm22, 0.0
    %46 = vst.msk [vmem:[#allocation3 + $0x38] sm:$0xff] %vm22, 0.0
    %47 = vst.msk [vmem:[#allocation3 + $0x40] sm:$0xff] %vm22, 0.0
    %48 = vst.msk [vmem:[#allocation3 + $0x48] sm:$0xff] %vm22, 0.0
    %49 = vst.msk [vmem:[#allocation3 + $0x50] sm:$0xff] %vm22, 0.0
    %50 = vst.msk [vmem:[#allocation3 + $0x58] sm:$0xff] %vm22, 0.0
    %51 = vst.msk [vmem:[#allocation3 + $0x60] sm:$0xff] %vm22, 0.0
    %52 = vst.msk [vmem:[#allocation3 + $0x68] sm:$0xff] %vm22, 0.0
    %53 = vst.msk [vmem:[#allocation3 + $0x70] sm:$0xff] %vm22, 0.0
    %54 = vst.msk [vmem:[#allocation3 + $0x78] sm:$0xff] %vm22, 0.0
    %55 = vst.msk [vmem:[#allocation4] sm:$0xff] %vm22, 0.0
    %56 = vst.msk [vmem:[#allocation4 + $0x8] sm:$0xff] %vm22, 0.0
    %57 = vst.msk [vmem:[#allocation4 + $0x10] sm:$0xff] %vm22, 0.0
    %58 = vst.msk [vmem:[#allocation4 + $0x18] sm:$0xff] %vm22, 0.0
    %59 = vst.msk [vmem:[#allocation4 + $0x20] sm:$0xff] %vm22, 0.0
    %60 = vst.msk [vmem:[#allocation4 + $0x28] sm:$0xff] %vm22, 0.0
    %61 = vst.msk [vmem:[#allocation4 + $0x30] sm:$0xff] %vm22, 0.0
    %62 = vst.msk [vmem:[#allocation4 + $0x38] sm:$0xff] %vm22, 0.0
    %63 = vst.msk [vmem:[#allocation4 + $0x40] sm:$0xff] %vm22, 0.0
    %64 = vst.msk [vmem:[#allocation4 + $0x48] sm:$0xff] %vm22, 0.0
    %65 = vst.msk [vmem:[#allocation4 + $0x50] sm:$0xff] %vm22, 0.0
    %66 = vst.msk [vmem:[#allocation4 + $0x58] sm:$0xff] %vm22, 0.0
    %67 = vst.msk [vmem:[#allocation4 + $0x60] sm:$0xff] %vm22, 0.0
    %68 = vst.msk [vmem:[#allocation4 + $0x68] sm:$0xff] %vm22, 0.0
    %69 = vst.msk [vmem:[#allocation4 + $0x70] sm:$0xff] %vm22, 0.0
    %70 = vst.msk [vmem:[#allocation4 + $0x78] sm:$0xff] %vm22, 0.0
    %71 = vst.msk [vmem:[#allocation5] sm:$0xff] %vm22, 0.0
    %72 = vst.msk [vmem:[#allocation5 + $0x8] sm:$0xff] %vm22, 0.0
    %73 = vst.msk [vmem:[#allocation5 + $0x10] sm:$0xff] %vm22, 0.0
    %74 = vst.msk [vmem:[#allocation5 + $0x18] sm:$0xff] %vm22, 0.0
    %75 = vst.msk [vmem:[#allocation5 + $0x20] sm:$0xff] %vm22, 0.0
    %76 = vst.msk [vmem:[#allocation5 + $0x28] sm:$0xff] %vm22, 0.0
    %77 = vst.msk [vmem:[#allocation5 + $0x30] sm:$0xff] %vm22, 0.0
    %78 = vst.msk [vmem:[#allocation5 + $0x38] sm:$0xff] %vm22, 0.0
    %79 = vst.msk [vmem:[#allocation5 + $0x40] sm:$0xff] %vm22, 0.0
    %80 = vst.msk [vmem:[#allocation5 + $0x48] sm:$0xff] %vm22, 0.0
    %81 = vst.msk [vmem:[#allocation5 + $0x50] sm:$0xff] %vm22, 0.0
    %82 = vst.msk [vmem:[#allocation5 + $0x58] sm:$0xff] %vm22, 0.0
    %83 = vst.msk [vmem:[#allocation5 + $0x60] sm:$0xff] %vm22, 0.0
    %84 = vst.msk [vmem:[#allocation5 + $0x68] sm:$0xff] %vm22, 0.0
    %85 = vst.msk [vmem:[#allocation5 + $0x70] sm:$0xff] %vm22, 0.0
    %86 = vst.msk [vmem:[#allocation5 + $0x78] sm:$0xff] %vm22, 0.0
  $region21: #{tpu_custom_call.1} parent=0 // pred_fallthru
    _
  %v87 = vld [vmem:[%s2] sm:$0xf]
  %v88 = vld [vmem:[%s2 + $0x4] sm:$0xf]
  %v89 = vld [vmem:[%s2 + $0x8] sm:$0xf]
  %v90 = vld [vmem:[%s2 + $0xc] sm:$0xf]
  %v91 = vld [vmem:[%s2 + $0x10] sm:$0xf]
  %v92 = vld [vmem:[%s2 + $0x14] sm:$0xf]
  %v93 = vld [vmem:[%s2 + $0x18] sm:$0xf]
  %v94 = vld [vmem:[%s2 + $0x1c] sm:$0xf]
  %v95 = vld [vmem:[%s2 + $0x20] sm:$0xf]
  %v96 = vld [vmem:[%s2 + $0x24] sm:$0xf]
  %v97 = vld [vmem:[%s2 + $0x28] sm:$0xf]
  %v98 = vld [vmem:[%s2 + $0x2c] sm:$0xf]
  %v99 = vld [vmem:[%s2 + $0x30] sm:$0xf]
  %v100 = vld [vmem:[%s2 + $0x34] sm:$0xf]
  %v101 = vld [vmem:[%s2 + $0x38] sm:$0xf]
  %v102 = vld [vmem:[%s2 + $0x3c] sm:$0xf]
  %v103 = vld [vmem:[%s3] sm:$0xf]
  %v104 = vld [vmem:[%s3 + $0x4] sm:$0xf]
  %v105 = vld [vmem:[%s3 + $0x8] sm:$0xf]
  %v106 = vld [vmem:[%s3 + $0xc] sm:$0xf]
  %v107 = vld [vmem:[%s3 + $0x10] sm:$0xf]
  %v108 = vld [vmem:[%s3 + $0x14] sm:$0xf]
  %v109 = vld [vmem:[%s3 + $0x18] sm:$0xf]
  %v110 = vld [vmem:[%s3 + $0x1c] sm:$0xf]
  %v111 = vld [vmem:[%s3 + $0x20] sm:$0xf]
  %v112 = vld [vmem:[%s3 + $0x24] sm:$0xf]
  %v113 = vld [vmem:[%s3 + $0x28] sm:$0xf]
  %v114 = vld [vmem:[%s3 + $0x2c] sm:$0xf]
  %v115 = vld [vmem:[%s3 + $0x30] sm:$0xf]
  %v116 = vld [vmem:[%s3 + $0x34] sm:$0xf]
  %v117 = vld [vmem:[%s3 + $0x38] sm:$0xf]
  %v118 = vld [vmem:[%s3 + $0x3c] sm:$0xf]
  %v135 = vunpack.c.l.b16 %v87
  %v136 = vunpack.c.l.b16 %v88
  %v137 = vunpack.c.l.b16 %v89
  %v138 = vunpack.c.l.b16 %v90
  %v139 = vunpack.c.l.b16 %v91
  %v140 = vunpack.c.l.b16 %v92
  %v141 = vunpack.c.l.b16 %v93
  %v142 = vunpack.c.l.b16 %v94
  %v143 = vunpack.c.l.b16 %v95
  %v144 = vunpack.c.l.b16 %v96
  %v145 = vunpack.c.l.b16 %v97
  %v146 = vunpack.c.l.b16 %v98
  %v147 = vunpack.c.l.b16 %v99
  %v148 = vunpack.c.l.b16 %v100
  %v149 = vunpack.c.l.b16 %v101
  %v150 = vunpack.c.l.b16 %v102
  %v151 = vpack.c.b16 %v136, %v135
  %v152 = vpack.c.b16 %v138, %v137
  %v153 = vpack.c.b16 %v140, %v139
  %v154 = vpack.c.b16 %v142, %v141
  %v155 = vpack.c.b16 %v144, %v143
  %v156 = vpack.c.b16 %v146, %v145
  %v157 = vpack.c.b16 %v148, %v147
  %v158 = vpack.c.b16 %v150, %v149
  %v183 = vunpack.c.l.b16 %v103
  %v184 = vunpack.c.l.b16 %v104
  %v185 = vunpack.c.l.b16 %v105
  %v186 = vunpack.c.l.b16 %v106
  %v187 = vunpack.c.l.b16 %v107
  %v188 = vunpack.c.l.b16 %v108
  %v189 = vunpack.c.l.b16 %v109
  %v190 = vunpack.c.l.b16 %v110
  %v191 = vunpack.c.l.b16 %v111
  %v192 = vunpack.c.l.b16 %v112
  %v193 = vunpack.c.l.b16 %v113
  %v194 = vunpack.c.l.b16 %v114
  %v195 = vunpack.c.l.b16 %v115
  %v196 = vunpack.c.l.b16 %v116
  %v197 = vunpack.c.l.b16 %v117
  %v198 = vunpack.c.l.b16 %v118
  %v199 = vpack.c.b16 %v184, %v183
  %v200 = vpack.c.b16 %v186, %v185
  %v201 = vpack.c.b16 %v188, %v187
  %v202 = vpack.c.b16 %v190, %v189
  %v203 = vpack.c.b16 %v192, %v191
  %v204 = vpack.c.b16 %v194, %v193
  %v205 = vpack.c.b16 %v196, %v195
  %v206 = vpack.c.b16 %v198, %v197
  %215 = vmatprep.subr.bf16.mxu0 0
  %216 = vmatpush1.bf16.xpose.msra.mxu0 %v206
  %217 = vmatprep.subr.bf16.mxu0 0
  %218 = vmatpush1.bf16.xpose.msra.mxu0 %v205
  %219 = vmatprep.subr.bf16.mxu0 0
  %220 = vmatpush1.bf16.xpose.msra.mxu0 %v204
  %221 = vmatprep.subr.bf16.mxu0 0
  %222 = vmatpush1.bf16.xpose.msra.mxu0 %v203
  %223 = vmatprep.subr.bf16.mxu0 0
  %224 = vmatpush1.bf16.xpose.msra.mxu0 %v202
  %225 = vmatprep.subr.bf16.mxu0 0
  %226 = vmatpush1.bf16.xpose.msra.mxu0 %v201
  %227 = vmatprep.subr.bf16.mxu0 0
  %228 = vmatpush1.bf16.xpose.msra.mxu0 %v200
  %229 = vmatprep.subr.bf16.mxu0 0
  %230 = vmatpush1.bf16.xpose.msra.mxu0 %v199
  %231 = vmatprep.subr.bf16.mxu0 0
  %232 = vmatpush2.bf16.xpose.msra.mxu0 0
  %233 = vmatprep.subr.bf16.mxu0 0
  %234 = vmatpush2.bf16.xpose.msra.mxu0 0
  %235 = vmatprep.subr.bf16.mxu0 0
  %236 = vmatpush2.bf16.xpose.msra.mxu0 0
  %237 = vmatprep.subr.bf16.mxu0 0
  %238 = vmatpush2.bf16.xpose.msra.mxu0 0
  %239 = vmatprep.subr.bf16.mxu0 0
  %240 = vmatpush2.bf16.xpose.msra.mxu0 0
  %241 = vmatprep.subr.bf16.mxu0 0
  %242 = vmatpush2.bf16.xpose.msra.mxu0 0
  %243 = vmatprep.subr.bf16.mxu0 0
  %244 = vmatpush2.bf16.xpose.msra.mxu0 0
  %245 = vmatprep.subr.bf16.mxu0 0
  %246 = vmatpush2.bf16.xpose.msra.mxu0 0
  %247 = vmatprep.mubr.bf16.mxu0 0
  %248 = vmatmul.mubr.bf16.gmra.mxu0 %v151
  %v249 = vpop.f32.mrf.mxu0
  %v250 = vadd.f32 0.0, %v249
  %v251 = vpop.f32.mrf.mxu0
  %v252 = vpop.f32.mrf.mxu0
  %v253 = vadd.f32 0.0, %v252
  %v254 = vpop.f32.mrf.mxu0
  %255 = vmatprep.mubr.bf16.mxu0 0
  %256 = vmatmul.mubr.bf16.gmra.mxu0 %v152
  %v257 = vpop.f32.mrf.mxu0
  %v258 = vadd.f32 0.0, %v257
  %v259 = vpop.f32.mrf.mxu0
  %v260 = vpop.f32.mrf.mxu0
  %v261 = vadd.f32 0.0, %v260
  %v262 = vpop.f32.mrf.mxu0
  %263 = vmatprep.mubr.bf16.mxu0 0
  %264 = vmatmul.mubr.bf16.gmra.mxu0 %v153
  %v265 = vpop.f32.mrf.mxu0
  %v266 = vadd.f32 0.0, %v265
  %v267 = vpop.f32.mrf.mxu0
  %v268 = vpop.f32.mrf.mxu0
  %v269 = vadd.f32 0.0, %v268
  %v270 = vpop.f32.mrf.mxu0
  %271 = vmatprep.mubr.bf16.mxu0 0
  %272 = vmatmul.mubr.bf16.gmra.mxu0 %v154
  %v273 = vpop.f32.mrf.mxu0
  %v274 = vadd.f32 0.0, %v273
  %v275 = vpop.f32.mrf.mxu0
  %v276 = vpop.f32.mrf.mxu0
  %v277 = vadd.f32 0.0, %v276
  %v278 = vpop.f32.mrf.mxu0
  %279 = vmatprep.mubr.bf16.mxu0 0
  %280 = vmatmul.mubr.bf16.gmra.mxu0 %v155
  %v281 = vpop.f32.mrf.mxu0
  %v282 = vadd.f32 0.0, %v281
  %v283 = vpop.f32.mrf.mxu0
  %v284 = vpop.f32.mrf.mxu0
  %v285 = vadd.f32 0.0, %v284
  %v286 = vpop.f32.mrf.mxu0
  %287 = vmatprep.mubr.bf16.mxu0 0
  %288 = vmatmul.mubr.bf16.gmra.mxu0 %v156
  %v289 = vpop.f32.mrf.mxu0
  %v290 = vadd.f32 0.0, %v289
  %v291 = vpop.f32.mrf.mxu0
  %v292 = vpop.f32.mrf.mxu0
  %v293 = vadd.f32 0.0, %v292
  %v294 = vpop.f32.mrf.mxu0
  %295 = vmatprep.mubr.bf16.mxu0 0
  %296 = vmatmul.mubr.bf16.gmra.mxu0 %v157
  %v297 = vpop.f32.mrf.mxu0
  %v298 = vadd.f32 0.0, %v297
  %v299 = vpop.f32.mrf.mxu0
  %v300 = vpop.f32.mrf.mxu0
  %v301 = vadd.f32 0.0, %v300
  %v302 = vpop.f32.mrf.mxu0
  %303 = vmatprep.mubr.bf16.mxu0 0
  %304 = vmatmul.mubr.bf16.gmra.mxu0 %v158
  %v305 = vpop.f32.mrf.mxu0
  %v306 = vadd.f32 0.0, %v305
  %v307 = vpop.f32.mrf.mxu0
  %v308 = vpop.f32.mrf.mxu0
  %v309 = vadd.f32 0.0, %v308
  %v310 = vpop.f32.mrf.mxu0
  %311 = vdwg.mxu0
  %v312 = vmul.f32 %v250, 14.285714
  %v313 = vmul.f32 %v253, 14.285714
  %v314 = vmul.f32 %v258, 14.285714
  %v315 = vmul.f32 %v261, 14.285714
  %v316 = vmul.f32 %v266, 14.285714
  %v317 = vmul.f32 %v269, 14.285714
  %v318 = vmul.f32 %v274, 14.285714
  %v319 = vmul.f32 %v277, 14.285714
  %v320 = vmul.f32 %v282, 14.285714
  %v321 = vmul.f32 %v285, 14.285714
  %v322 = vmul.f32 %v290, 14.285714
  %v323 = vmul.f32 %v293, 14.285714
  %v324 = vmul.f32 %v298, 14.285714
  %v325 = vmul.f32 %v301, 14.285714
  %v326 = vmul.f32 %v306, 14.285714
  %v327 = vmul.f32 %v309, 14.285714
  %s328 = smul.u32 0, 128
  %v329 = vlaneseq
  %v330 = vshrl.u32 %v329, 7
  %v331 = vadd.s32 %v330, 8
  %v332 = vadd.s32 %v330, 16
  %v333 = vadd.s32 %v330, 24
  %v334 = vadd.s32 %v330, 32
  %v335 = vadd.s32 %v330, 40
  %v336 = vadd.s32 %v330, 48
  %v337 = vadd.s32 %v330, 56
  %v338 = vadd.s32 %v330, 64
  %v339 = vadd.s32 %v330, 72
  %v340 = vadd.s32 %v330, 80
  %v341 = vadd.s32 %v330, 88
  %v342 = vadd.s32 %v330, 96
  %v343 = vadd.s32 %v330, 104
  %v344 = vadd.s32 %v330, 112
  %v345 = vadd.s32 %v330, 120
  %v346 = vstv %s328
  %v347 = vadd.s32 %v346, %v330
  %v348 = vadd.s32 %v346, %v331
  %v349 = vadd.s32 %v346, %v332
  %v350 = vadd.s32 %v346, %v333
  %v351 = vadd.s32 %v346, %v334
  %v352 = vadd.s32 %v346, %v335
  %v353 = vadd.s32 %v346, %v336
  %v354 = vadd.s32 %v346, %v337
  %v355 = vadd.s32 %v346, %v338
  %v356 = vadd.s32 %v346, %v339
  %v357 = vadd.s32 %v346, %v340
  %v358 = vadd.s32 %v346, %v341
  %v359 = vadd.s32 %v346, %v342
  %v360 = vadd.s32 %v346, %v343
  %v361 = vadd.s32 %v346, %v344
  %v362 = vadd.s32 %v346, %v345
  %s363 = smul.u32 0, 128
  %v364 = vlaneseq
  %v365 = vand.u32 %v364, 127
  %v366 = vstv %s363
  %v367 = vadd.s32 %v366, %v365
  %vm368 = vcmp.lt.s32.totalorder %v367, 16
  %vm369 = vcmp.ne.s32.totalorder %v347, %v367
  %vm370 = vcmp.ne.s32.totalorder %v348, %v367
  %vm371 = vcmp.ne.s32.totalorder %v349, %v367
  %vm372 = vcmp.ne.s32.totalorder %v350, %v367
  %vm373 = vcmp.ne.s32.totalorder %v351, %v367
  %vm374 = vcmp.ne.s32.totalorder %v352, %v367
  %vm375 = vcmp.ne.s32.totalorder %v353, %v367
  %vm376 = vcmp.ne.s32.totalorder %v354, %v367
  %vm377 = vcmp.ne.s32.totalorder %v355, %v367
  %vm378 = vcmp.ne.s32.totalorder %v356, %v367
  %vm379 = vcmp.ne.s32.totalorder %v357, %v367
  %vm380 = vcmp.ne.s32.totalorder %v358, %v367
  %vm381 = vcmp.ne.s32.totalorder %v359, %v367
  %vm382 = vcmp.ne.s32.totalorder %v360, %v367
  %vm383 = vcmp.ne.s32.totalorder %v361, %v367
  %vm384 = vcmp.ne.s32.totalorder %v362, %v367
  %v385 = vsel %vm368, %v312, -1e+30
  %v386 = vsel %vm368, %v313, -1e+30
  %v387 = vsel %vm368, %v314, -1e+30
  %v388 = vsel %vm368, %v315, -1e+30
  %v389 = vsel %vm368, %v316, -1e+30
  %v390 = vsel %vm368, %v317, -1e+30
  %v391 = vsel %vm368, %v318, -1e+30
  %v392 = vsel %vm368, %v319, -1e+30
  %v393 = vsel %vm368, %v320, -1e+30
  %v394 = vsel %vm368, %v321, -1e+30
  %v395 = vsel %vm368, %v322, -1e+30
  %v396 = vsel %vm368, %v323, -1e+30
  %v397 = vsel %vm368, %v324, -1e+30
  %v398 = vsel %vm368, %v325, -1e+30
  %v399 = vsel %vm368, %v326, -1e+30
  %v400 = vsel %vm368, %v327, -1e+30
  %v401 = vld [vmem:[#allocation2] sm:$0xff]
  %v402 = vld [vmem:[#allocation2 + $0x8] sm:$0xff]
  %v403 = vld [vmem:[#allocation2 + $0x10] sm:$0xff]
  %v404 = vld [vmem:[#allocation2 + $0x18] sm:$0xff]
  %v405 = vld [vmem:[#allocation2 + $0x20] sm:$0xff]
  %v406 = vld [vmem:[#allocation2 + $0x28] sm:$0xff]
  %v407 = vld [vmem:[#allocation2 + $0x30] sm:$0xff]
  %v408 = vld [vmem:[#allocation2 + $0x38] sm:$0xff]
  %v409 = vld [vmem:[#allocation2 + $0x40] sm:$0xff]
  %v410 = vld [vmem:[#allocation2 + $0x48] sm:$0xff]
  %v411 = vld [vmem:[#allocation2 + $0x50] sm:$0xff]
  %v412 = vld [vmem:[#allocation2 + $0x58] sm:$0xff]
  %v413 = vld [vmem:[#allocation2 + $0x60] sm:$0xff]
  %v414 = vld [vmem:[#allocation2 + $0x68] sm:$0xff]
  %v415 = vld [vmem:[#allocation2 + $0x70] sm:$0xff]
  %v416 = vld [vmem:[#allocation2 + $0x78] sm:$0xff]
  %417 = vmax.xlane.f32.xlu0 %v385
  %v418 = vpop.xlane.xlu0 %417
  %419 = vmax.xlane.f32.xlu0 %v386
  %v420 = vpop.xlane.xlu0 %419
  %421 = vmax.xlane.f32.xlu0 %v387
  %v422 = vpop.xlane.xlu0 %421
  %423 = vmax.xlane.f32.xlu0 %v388
  %v424 = vpop.xlane.xlu0 %423
  %425 = vmax.xlane.f32.xlu0 %v389
  %v426 = vpop.xlane.xlu0 %425
  %427 = vmax.xlane.f32.xlu0 %v390
  %v428 = vpop.xlane.xlu0 %427
  %429 = vmax.xlane.f32.xlu0 %v391
  %v430 = vpop.xlane.xlu0 %429
  %431 = vmax.xlane.f32.xlu0 %v392
  %v432 = vpop.xlane.xlu0 %431
  %433 = vmax.xlane.f32.xlu0 %v393
  %v434 = vpop.xlane.xlu0 %433
  %435 = vmax.xlane.f32.xlu0 %v394
  %v436 = vpop.xlane.xlu0 %435
  %437 = vmax.xlane.f32.xlu0 %v395
  %v438 = vpop.xlane.xlu0 %437
  %439 = vmax.xlane.f32.xlu0 %v396
  %v440 = vpop.xlane.xlu0 %439
  %441 = vmax.xlane.f32.xlu0 %v397
  %v442 = vpop.xlane.xlu0 %441
  %443 = vmax.xlane.f32.xlu0 %v398
  %v444 = vpop.xlane.xlu0 %443
  %445 = vmax.xlane.f32.xlu0 %v399
  %v446 = vpop.xlane.xlu0 %445
  %447 = vmax.xlane.f32.xlu0 %v400
  %v448 = vpop.xlane.xlu0 %447
  %v449 = vmax.f32 %v401, %v418
  %v450 = vmax.f32 %v402, %v420
  %v451 = vmax.f32 %v403, %v422
  %v452 = vmax.f32 %v404, %v424
  %v453 = vmax.f32 %v405, %v426
  %v454 = vmax.f32 %v406, %v428
  %v455 = vmax.f32 %v407, %v430
  %v456 = vmax.f32 %v408, %v432
  %v457 = vmax.f32 %v409, %v434
  %v458 = vmax.f32 %v410, %v436
  %v459 = vmax.f32 %v411, %v438
  %v460 = vmax.f32 %v412, %v440
  %v461 = vmax.f32 %v413, %v442
  %v462 = vmax.f32 %v414, %v444
  %v463 = vmax.f32 %v415, %v446
  %v464 = vmax.f32 %v416, %v448
  %v465 = vsel %vm369, %v385, -1e+30
  %v466 = vsel %vm370, %v386, -1e+30
  %v467 = vsel %vm371, %v387, -1e+30
  %v468 = vsel %vm372, %v388, -1e+30
  %v469 = vsel %vm373, %v389, -1e+30
  %v470 = vsel %vm374, %v390, -1e+30
  %v471 = vsel %vm375, %v391, -1e+30
  %v472 = vsel %vm376, %v392, -1e+30
  %v473 = vsel %vm377, %v393, -1e+30
  %v474 = vsel %vm378, %v394, -1e+30
  %v475 = vsel %vm379, %v395, -1e+30
  %v476 = vsel %vm380, %v396, -1e+30
  %v477 = vsel %vm381, %v397, -1e+30
  %v478 = vsel %vm382, %v398, -1e+30
  %v479 = vsel %vm383, %v399, -1e+30
  %v480 = vsel %vm384, %v400, -1e+30
  %v481 = vsub.f32 %v401, %v449
  %v482 = vsub.f32 %v402, %v450
  %v483 = vsub.f32 %v403, %v451
  %v484 = vsub.f32 %v404, %v452
  %v485 = vsub.f32 %v405, %v453
  %v486 = vsub.f32 %v406, %v454
  %v487 = vsub.f32 %v407, %v455
  %v488 = vsub.f32 %v408, %v456
  %v489 = vsub.f32 %v409, %v457
  %v490 = vsub.f32 %v410, %v458
  %v491 = vsub.f32 %v411, %v459
  %v492 = vsub.f32 %v412, %v460
  %v493 = vsub.f32 %v413, %v461
  %v494 = vsub.f32 %v414, %v462
  %v495 = vsub.f32 %v415, %v463
  %v496 = vsub.f32 %v416, %v464
  %v497 = vmul.f32 %v481, 1.442695
  %v498 = vpow.pop %v497
  %v499 = vmul.f32 %v482, 1.442695
  %v500 = vpow.pop %v499
  %v501 = vmul.f32 %v483, 1.442695
  %v502 = vpow.pop %v501
  %v503 = vmul.f32 %v484, 1.442695
  %v504 = vpow.pop %v503
  %v505 = vmul.f32 %v485, 1.442695
  %v506 = vpow.pop %v505
  %v507 = vmul.f32 %v486, 1.442695
  %v508 = vpow.pop %v507
  %v509 = vmul.f32 %v487, 1.442695
  %v510 = vpow.pop %v509
  %v511 = vmul.f32 %v488, 1.442695
  %v512 = vpow.pop %v511
  %v513 = vmul.f32 %v489, 1.442695
  %v514 = vpow.pop %v513
  %v515 = vmul.f32 %v490, 1.442695
  %v516 = vpow.pop %v515
  %v517 = vmul.f32 %v491, 1.442695
  %v518 = vpow.pop %v517
  %v519 = vmul.f32 %v492, 1.442695
  %v520 = vpow.pop %v519
  %v521 = vmul.f32 %v493, 1.442695
  %v522 = vpow.pop %v521
  %v523 = vmul.f32 %v494, 1.442695
  %v524 = vpow.pop %v523
  %v525 = vmul.f32 %v495, 1.442695
  %v526 = vpow.pop %v525
  %v527 = vmul.f32 %v496, 1.442695
  %v528 = vpow.pop %v527
  %v529 = vld [vmem:[#allocation3] sm:$0xff]
  %v530 = vld [vmem:[#allocation3 + $0x8] sm:$0xff]
  %v531 = vld [vmem:[#allocation3 + $0x10] sm:$0xff]
  %v532 = vld [vmem:[#allocation3 + $0x18] sm:$0xff]
  %v533 = vld [vmem:[#allocation3 + $0x20] sm:$0xff]
  %v534 = vld [vmem:[#allocation3 + $0x28] sm:$0xff]
  %v535 = vld [vmem:[#allocation3 + $0x30] sm:$0xff]
  %v536 = vld [vmem:[#allocation3 + $0x38] sm:$0xff]
  %v537 = vld [vmem:[#allocation3 + $0x40] sm:$0xff]
  %v538 = vld [vmem:[#allocation3 + $0x48] sm:$0xff]
  %v539 = vld [vmem:[#allocation3 + $0x50] sm:$0xff]
  %v540 = vld [vmem:[#allocation3 + $0x58] sm:$0xff]
  %v541 = vld [vmem:[#allocation3 + $0x60] sm:$0xff]
  %v542 = vld [vmem:[#allocation3 + $0x68] sm:$0xff]
  %v543 = vld [vmem:[#allocation3 + $0x70] sm:$0xff]
  %v544 = vld [vmem:[#allocation3 + $0x78] sm:$0xff]
  %v545 = vmul.f32 %v498, %v529
  %v546 = vmul.f32 %v500, %v530
  %v547 = vmul.f32 %v502, %v531
  %v548 = vmul.f32 %v504, %v532
  %v549 = vmul.f32 %v506, %v533
  %v550 = vmul.f32 %v508, %v534
  %v551 = vmul.f32 %v510, %v535
  %v552 = vmul.f32 %v512, %v536
  %v553 = vmul.f32 %v514, %v537
  %v554 = vmul.f32 %v516, %v538
  %v555 = vmul.f32 %v518, %v539
  %v556 = vmul.f32 %v520, %v540
  %v557 = vmul.f32 %v522, %v541
  %v558 = vmul.f32 %v524, %v542
  %v559 = vmul.f32 %v526, %v543
  %v560 = vmul.f32 %v528, %v544
  %562 = vset.pattern.permute.xlu0 0
  %563 = vperm.xlu0 %562, %v449
  %v564 = vpop.permute.xlu0 %563
  %567 = vset.pattern.permute.xlu0 0
  %568 = vperm.xlu0 %567, %v450
  %v569 = vpop.permute.xlu0 %568
  %572 = vset.pattern.permute.xlu0 0
  %573 = vperm.xlu0 %572, %v451
  %v574 = vpop.permute.xlu0 %573
  %577 = vset.pattern.permute.xlu0 0
  %578 = vperm.xlu0 %577, %v452
  %v579 = vpop.permute.xlu0 %578
  %582 = vset.pattern.permute.xlu0 0
  %583 = vperm.xlu0 %582, %v453
  %v584 = vpop.permute.xlu0 %583
  %587 = vset.pattern.permute.xlu0 0
  %588 = vperm.xlu0 %587, %v454
  %v589 = vpop.permute.xlu0 %588
  %592 = vset.pattern.permute.xlu0 0
  %593 = vperm.xlu0 %592, %v455
  %v594 = vpop.permute.xlu0 %593
  %597 = vset.pattern.permute.xlu0 0
  %598 = vperm.xlu0 %597, %v456
  %v599 = vpop.permute.xlu0 %598
  %602 = vset.pattern.permute.xlu0 0
  %603 = vperm.xlu0 %602, %v457
  %v604 = vpop.permute.xlu0 %603
  %607 = vset.pattern.permute.xlu0 0
  %608 = vperm.xlu0 %607, %v458
  %v609 = vpop.permute.xlu0 %608
  %612 = vset.pattern.permute.xlu0 0
  %613 = vperm.xlu0 %612, %v459
  %v614 = vpop.permute.xlu0 %613
  %617 = vset.pattern.permute.xlu0 0
  %618 = vperm.xlu0 %617, %v460
  %v619 = vpop.permute.xlu0 %618
  %622 = vset.pattern.permute.xlu0 0
  %623 = vperm.xlu0 %622, %v461
  %v624 = vpop.permute.xlu0 %623
  %627 = vset.pattern.permute.xlu0 0
  %628 = vperm.xlu0 %627, %v462
  %v629 = vpop.permute.xlu0 %628
  %632 = vset.pattern.permute.xlu0 0
  %633 = vperm.xlu0 %632, %v463
  %v634 = vpop.permute.xlu0 %633
  %637 = vset.pattern.permute.xlu0 0
  %638 = vperm.xlu0 %637, %v464
  %v639 = vpop.permute.xlu0 %638
  %v641 = vsub.f32 %v465, %v564
  %v642 = vsub.f32 %v466, %v569
  %v643 = vsub.f32 %v467, %v574
  %v644 = vsub.f32 %v468, %v579
  %v645 = vsub.f32 %v469, %v584
  %v646 = vsub.f32 %v470, %v589
  %v647 = vsub.f32 %v471, %v594
  %v648 = vsub.f32 %v472, %v599
  %v649 = vsub.f32 %v473, %v604
  %v650 = vsub.f32 %v474, %v609
  %v651 = vsub.f32 %v475, %v614
  %v652 = vsub.f32 %v476, %v619
  %v653 = vsub.f32 %v477, %v624
  %v654 = vsub.f32 %v478, %v629
  %v655 = vsub.f32 %v479, %v634
  %v656 = vsub.f32 %v480, %v639
  %v657 = vmul.f32 %v641, 1.442695
  %v658 = vpow.pop %v657
  %v659 = vmul.f32 %v642, 1.442695
  %v660 = vpow.pop %v659
  %v661 = vmul.f32 %v643, 1.442695
  %v662 = vpow.pop %v661
  %v663 = vmul.f32 %v644, 1.442695
  %v664 = vpow.pop %v663
  %v665 = vmul.f32 %v645, 1.442695
  %v666 = vpow.pop %v665
  %v667 = vmul.f32 %v646, 1.442695
  %v668 = vpow.pop %v667
  %v669 = vmul.f32 %v647, 1.442695
  %v670 = vpow.pop %v669
  %v671 = vmul.f32 %v648, 1.442695
  %v672 = vpow.pop %v671
  %v673 = vmul.f32 %v649, 1.442695
  %v674 = vpow.pop %v673
  %v675 = vmul.f32 %v650, 1.442695
  %v676 = vpow.pop %v675
  %v677 = vmul.f32 %v651, 1.442695
  %v678 = vpow.pop %v677
  %v679 = vmul.f32 %v652, 1.442695
  %v680 = vpow.pop %v679
  %v681 = vmul.f32 %v653, 1.442695
  %v682 = vpow.pop %v681
  %v683 = vmul.f32 %v654, 1.442695
  %v684 = vpow.pop %v683
  %v685 = vmul.f32 %v655, 1.442695
  %v686 = vpow.pop %v685
  %v687 = vmul.f32 %v656, 1.442695
  %v688 = vpow.pop %v687
  %689 = vadd.xlane.f32.xlu0 %v658
  %v690 = vpop.xlane.xlu0 %689
  %691 = vadd.xlane.f32.xlu0 %v660
  %v692 = vpop.xlane.xlu0 %691
  %693 = vadd.xlane.f32.xlu0 %v662
  %v694 = vpop.xlane.xlu0 %693
  %695 = vadd.xlane.f32.xlu0 %v664
  %v696 = vpop.xlane.xlu0 %695
  %697 = vadd.xlane.f32.xlu0 %v666
  %v698 = vpop.xlane.xlu0 %697
  %699 = vadd.xlane.f32.xlu0 %v668
  %v700 = vpop.xlane.xlu0 %699
  %701 = vadd.xlane.f32.xlu0 %v670
  %v702 = vpop.xlane.xlu0 %701
  %703 = vadd.xlane.f32.xlu0 %v672
  %v704 = vpop.xlane.xlu0 %703
  %705 = vadd.xlane.f32.xlu0 %v674
  %v706 = vpop.xlane.xlu0 %705
  %707 = vadd.xlane.f32.xlu0 %v676
  %v708 = vpop.xlane.xlu0 %707
  %709 = vadd.xlane.f32.xlu0 %v678
  %v710 = vpop.xlane.xlu0 %709
  %711 = vadd.xlane.f32.xlu0 %v680
  %v712 = vpop.xlane.xlu0 %711
  %713 = vadd.xlane.f32.xlu0 %v682
  %v714 = vpop.xlane.xlu0 %713
  %715 = vadd.xlane.f32.xlu0 %v684
  %v716 = vpop.xlane.xlu0 %715
  %717 = vadd.xlane.f32.xlu0 %v686
  %v718 = vpop.xlane.xlu0 %717
  %719 = vadd.xlane.f32.xlu0 %v688
  %v720 = vpop.xlane.xlu0 %719
  %v721 = vadd.f32 %v545, %v690
  %v722 = vadd.f32 %v546, %v692
  %v723 = vadd.f32 %v547, %v694
  %v724 = vadd.f32 %v548, %v696
  %v725 = vadd.f32 %v549, %v698
  %v726 = vadd.f32 %v550, %v700
  %v727 = vadd.f32 %v551, %v702
  %v728 = vadd.f32 %v552, %v704
  %v729 = vadd.f32 %v553, %v706
  %v730 = vadd.f32 %v554, %v708
  %v731 = vadd.f32 %v555, %v710
  %v732 = vadd.f32 %v556, %v712
  %v733 = vadd.f32 %v557, %v714
  %v734 = vadd.f32 %v558, %v716
  %v735 = vadd.f32 %v559, %v718
  %v736 = vadd.f32 %v560, %v720
  %vm737 = vcmask 7168
  %738 = vst.msk [vmem:[#allocation3] sm:$0xff] %vm737, %v721
  %739 = vst.msk [vmem:[#allocation3 + $0x8] sm:$0xff] %vm737, %v722
  %740 = vst.msk [vmem:[#allocation3 + $0x10] sm:$0xff] %vm737, %v723
  %741 = vst.msk [vmem:[#allocation3 + $0x18] sm:$0xff] %vm737, %v724
  %742 = vst.msk [vmem:[#allocation3 + $0x20] sm:$0xff] %vm737, %v725
  %743 = vst.msk [vmem:[#allocation3 + $0x28] sm:$0xff] %vm737, %v726
  %744 = vst.msk [vmem:[#allocation3 + $0x30] sm:$0xff] %vm737, %v727
  %745 = vst.msk [vmem:[#allocation3 + $0x38] sm:$0xff] %vm737, %v728
  %746 = vst.msk [vmem:[#allocation3 + $0x40] sm:$0xff] %vm737, %v729
  %747 = vst.msk [vmem:[#allocation3 + $0x48] sm:$0xff] %vm737, %v730
  %748 = vst.msk [vmem:[#allocation3 + $0x50] sm:$0xff] %vm737, %v731
  %749 = vst.msk [vmem:[#allocation3 + $0x58] sm:$0xff] %vm737, %v732
  %750 = vst.msk [vmem:[#allocation3 + $0x60] sm:$0xff] %vm737, %v733
  %751 = vst.msk [vmem:[#allocation3 + $0x68] sm:$0xff] %vm737, %v734
  %752 = vst.msk [vmem:[#allocation3 + $0x70] sm:$0xff] %vm737, %v735
  %753 = vst.msk [vmem:[#allocation3 + $0x78] sm:$0xff] %vm737, %v736
  %754 = vst.msk [vmem:[#allocation2] sm:$0xff] %vm737, %v449
  %755 = vst.msk [vmem:[#allocation2 + $0x8] sm:$0xff] %vm737, %v450
  %756 = vst.msk [vmem:[#allocation2 + $0x10] sm:$0xff] %vm737, %v451
  %757 = vst.msk [vmem:[#allocation2 + $0x18] sm:$0xff] %vm737, %v452
  %758 = vst.msk [vmem:[#allocation2 + $0x20] sm:$0xff] %vm737, %v453
  %759 = vst.msk [vmem:[#allocation2 + $0x28] sm:$0xff] %vm737, %v454
  %760 = vst.msk [vmem:[#allocation2 + $0x30] sm:$0xff] %vm737, %v455
  %761 = vst.msk [vmem:[#allocation2 + $0x38] sm:$0xff] %vm737, %v456
  %762 = vst.msk [vmem:[#allocation2 + $0x40] sm:$0xff] %vm737, %v457
  %763 = vst.msk [vmem:[#allocation2 + $0x48] sm:$0xff] %vm737, %v458
  %764 = vst.msk [vmem:[#allocation2 + $0x50] sm:$0xff] %vm737, %v459
  %765 = vst.msk [vmem:[#allocation2 + $0x58] sm:$0xff] %vm737, %v460
  %766 = vst.msk [vmem:[#allocation2 + $0x60] sm:$0xff] %vm737, %v461
  %767 = vst.msk [vmem:[#allocation2 + $0x68] sm:$0xff] %vm737, %v462
  %768 = vst.msk [vmem:[#allocation2 + $0x70] sm:$0xff] %vm737, %v463
  %769 = vst.msk [vmem:[#allocation2 + $0x78] sm:$0xff] %vm737, %v464
  %v770 = vld [vmem:[%s0] sm:$0xff]
  %v771 = vld [vmem:[%s0 + $0x8] sm:$0xff]
  %v772 = vld [vmem:[%s0 + $0x10] sm:$0xff]
  %v773 = vld [vmem:[%s0 + $0x18] sm:$0xff]
  %v774 = vld [vmem:[%s0 + $0x20] sm:$0xff]
  %v775 = vld [vmem:[%s0 + $0x28] sm:$0xff]
  %v776 = vld [vmem:[%s0 + $0x30] sm:$0xff]
  %v777 = vld [vmem:[%s0 + $0x38] sm:$0xff]
  %v778 = vld [vmem:[%s0 + $0x40] sm:$0xff]
  %v779 = vld [vmem:[%s0 + $0x48] sm:$0xff]
  %v780 = vld [vmem:[%s0 + $0x50] sm:$0xff]
  %v781 = vld [vmem:[%s0 + $0x58] sm:$0xff]
  %v782 = vld [vmem:[%s0 + $0x60] sm:$0xff]
  %v783 = vld [vmem:[%s0 + $0x68] sm:$0xff]
  %v784 = vld [vmem:[%s0 + $0x70] sm:$0xff]
  %v785 = vld [vmem:[%s0 + $0x78] sm:$0xff]
  %v786 = vld [vmem:[%s1] sm:$0x1]
  %787 = vset.pattern.permute.xlu0 0
  %788 = vperm.xlu0 %787, %v770
  %v789 = vpop.permute.xlu0 %788
  %790 = vset.pattern.permute.xlu0 0
  %791 = vperm.xlu0 %790, %v771
  %v792 = vpop.permute.xlu0 %791
  %793 = vset.pattern.permute.xlu0 0
  %794 = vperm.xlu0 %793, %v772
  %v795 = vpop.permute.xlu0 %794
  %796 = vset.pattern.permute.xlu0 0
  %797 = vperm.xlu0 %796, %v773
  %v798 = vpop.permute.xlu0 %797
  %799 = vset.pattern.permute.xlu0 0
  %800 = vperm.xlu0 %799, %v774
  %v801 = vpop.permute.xlu0 %800
  %802 = vset.pattern.permute.xlu0 0
  %803 = vperm.xlu0 %802, %v775
  %v804 = vpop.permute.xlu0 %803
  %805 = vset.pattern.permute.xlu0 0
  %806 = vperm.xlu0 %805, %v776
  %v807 = vpop.permute.xlu0 %806
  %808 = vset.pattern.permute.xlu0 0
  %809 = vperm.xlu0 %808, %v777
  %v810 = vpop.permute.xlu0 %809
  %811 = vset.pattern.permute.xlu0 0
  %812 = vperm.xlu0 %811, %v778
  %v813 = vpop.permute.xlu0 %812
  %814 = vset.pattern.permute.xlu0 0
  %815 = vperm.xlu0 %814, %v779
  %v816 = vpop.permute.xlu0 %815
  %817 = vset.pattern.permute.xlu0 0
  %818 = vperm.xlu0 %817, %v780
  %v819 = vpop.permute.xlu0 %818
  %820 = vset.pattern.permute.xlu0 0
  %821 = vperm.xlu0 %820, %v781
  %v822 = vpop.permute.xlu0 %821
  %823 = vset.pattern.permute.xlu0 0
  %824 = vperm.xlu0 %823, %v782
  %v825 = vpop.permute.xlu0 %824
  %826 = vset.pattern.permute.xlu0 0
  %827 = vperm.xlu0 %826, %v783
  %v828 = vpop.permute.xlu0 %827
  %829 = vset.pattern.permute.xlu0 0
  %830 = vperm.xlu0 %829, %v784
  %v831 = vpop.permute.xlu0 %830
  %832 = vset.pattern.permute.xlu0 0
  %833 = vperm.xlu0 %832, %v785
  %v834 = vpop.permute.xlu0 %833
  %v835 = vlaneseq
  %v836 = vshrl.u32 %v835, 7
  %v837 = vsub.s32 0, %v836
  %v838 = vrot.slane %v786, %v837
  %vm839 = vcmp.eq.s32.totalorder %v789, %v838
  %vm840 = vcmp.eq.s32.totalorder %v792, %v838
  %vm841 = vcmp.eq.s32.totalorder %v795, %v838
  %vm842 = vcmp.eq.s32.totalorder %v798, %v838
  %vm843 = vcmp.eq.s32.totalorder %v801, %v838
  %vm844 = vcmp.eq.s32.totalorder %v804, %v838
  %vm845 = vcmp.eq.s32.totalorder %v807, %v838
  %vm846 = vcmp.eq.s32.totalorder %v810, %v838
  %vm847 = vcmp.eq.s32.totalorder %v813, %v838
  %vm848 = vcmp.eq.s32.totalorder %v816, %v838
  %vm849 = vcmp.eq.s32.totalorder %v819, %v838
  %vm850 = vcmp.eq.s32.totalorder %v822, %v838
  %vm851 = vcmp.eq.s32.totalorder %v825, %v838
  %vm852 = vcmp.eq.s32.totalorder %v828, %v838
  %vm853 = vcmp.eq.s32.totalorder %v831, %v838
  %vm854 = vcmp.eq.s32.totalorder %v834, %v838
  %vm855 = vmand %vm839, %vm369
  %vm856 = vmand %vm840, %vm370
  %vm857 = vmand %vm841, %vm371
  %vm858 = vmand %vm842, %vm372
  %vm859 = vmand %vm843, %vm373
  %vm860 = vmand %vm844, %vm374
  %vm861 = vmand %vm845, %vm375
  %vm862 = vmand %vm846, %vm376
  %vm863 = vmand %vm847, %vm377
  %vm864 = vmand %vm848, %vm378
  %vm865 = vmand %vm849, %vm379
  %vm866 = vmand %vm850, %vm380
  %vm867 = vmand %vm851, %vm381
  %vm868 = vmand %vm852, %vm382
  %vm869 = vmand %vm853, %vm383
  %vm870 = vmand %vm854, %vm384
  %vm871 = vmand %vm855, %vm368
  %vm872 = vmand %vm856, %vm368
  %vm873 = vmand %vm857, %vm368
  %vm874 = vmand %vm858, %vm368
  %vm875 = vmand %vm859, %vm368
  %vm876 = vmand %vm860, %vm368
  %vm877 = vmand %vm861, %vm368
  %vm878 = vmand %vm862, %vm368
  %vm879 = vmand %vm863, %vm368
  %vm880 = vmand %vm864, %vm368
  %vm881 = vmand %vm865, %vm368
  %vm882 = vmand %vm866, %vm368
  %vm883 = vmand %vm867, %vm368
  %vm884 = vmand %vm868, %vm368
  %vm885 = vmand %vm869, %vm368
  %vm886 = vmand %vm870, %vm368
  %v887 = vsel %vm871, 1.0, 0.0
  %v888 = vsel %vm872, 1.0, 0.0
  %v889 = vsel %vm873, 1.0, 0.0
  %v890 = vsel %vm874, 1.0, 0.0
  %v891 = vsel %vm875, 1.0, 0.0
  %v892 = vsel %vm876, 1.0, 0.0
  %v893 = vsel %vm877, 1.0, 0.0
  %v894 = vsel %vm878, 1.0, 0.0
  %v895 = vsel %vm879, 1.0, 0.0
  %v896 = vsel %vm880, 1.0, 0.0
  %v897 = vsel %vm881, 1.0, 0.0
  %v898 = vsel %vm882, 1.0, 0.0
  %v899 = vsel %vm883, 1.0, 0.0
  %v900 = vsel %vm884, 1.0, 0.0
  %v901 = vsel %vm885, 1.0, 0.0
  %v902 = vsel %vm886, 1.0, 0.0
  %v903 = vld [vmem:[#allocation4] sm:$0xff]
  %v904 = vld [vmem:[#allocation4 + $0x8] sm:$0xff]
  %v905 = vld [vmem:[#allocation4 + $0x10] sm:$0xff]
  %v906 = vld [vmem:[#allocation4 + $0x18] sm:$0xff]
  %v907 = vld [vmem:[#allocation4 + $0x20] sm:$0xff]
  %v908 = vld [vmem:[#allocation4 + $0x28] sm:$0xff]
  %v909 = vld [vmem:[#allocation4 + $0x30] sm:$0xff]
  %v910 = vld [vmem:[#allocation4 + $0x38] sm:$0xff]
  %v911 = vld [vmem:[#allocation4 + $0x40] sm:$0xff]
  %v912 = vld [vmem:[#allocation4 + $0x48] sm:$0xff]
  %v913 = vld [vmem:[#allocation4 + $0x50] sm:$0xff]
  %v914 = vld [vmem:[#allocation4 + $0x58] sm:$0xff]
  %v915 = vld [vmem:[#allocation4 + $0x60] sm:$0xff]
  %v916 = vld [vmem:[#allocation4 + $0x68] sm:$0xff]
  %v917 = vld [vmem:[#allocation4 + $0x70] sm:$0xff]
  %v918 = vld [vmem:[#allocation4 + $0x78] sm:$0xff]
  %v919 = vmul.f32 %v887, %v312
  %v920 = vmul.f32 %v888, %v313
  %v921 = vmul.f32 %v889, %v314
  %v922 = vmul.f32 %v890, %v315
  %v923 = vmul.f32 %v891, %v316
  %v924 = vmul.f32 %v892, %v317
  %v925 = vmul.f32 %v893, %v318
  %v926 = vmul.f32 %v894, %v319
  %v927 = vmul.f32 %v895, %v320
  %v928 = vmul.f32 %v896, %v321
  %v929 = vmul.f32 %v897, %v322
  %v930 = vmul.f32 %v898, %v323
  %v931 = vmul.f32 %v899, %v324
  %v932 = vmul.f32 %v900, %v325
  %v933 = vmul.f32 %v901, %v326
  %v934 = vmul.f32 %v902, %v327
  %935 = vadd.xlane.f32.xlu0 %v919
  %v936 = vpop.xlane.xlu0 %935
  %937 = vadd.xlane.f32.xlu0 %v920
  %v938 = vpop.xlane.xlu0 %937
  %939 = vadd.xlane.f32.xlu0 %v921
  %v940 = vpop.xlane.xlu0 %939
  %941 = vadd.xlane.f32.xlu0 %v922
  %v942 = vpop.xlane.xlu0 %941
  %943 = vadd.xlane.f32.xlu0 %v923
  %v944 = vpop.xlane.xlu0 %943
  %945 = vadd.xlane.f32.xlu0 %v924
  %v946 = vpop.xlane.xlu0 %945
  %947 = vadd.xlane.f32.xlu0 %v925
  %v948 = vpop.xlane.xlu0 %947
  %949 = vadd.xlane.f32.xlu0 %v926
  %v950 = vpop.xlane.xlu0 %949
  %951 = vadd.xlane.f32.xlu0 %v927
  %v952 = vpop.xlane.xlu0 %951
  %953 = vadd.xlane.f32.xlu0 %v928
  %v954 = vpop.xlane.xlu0 %953
  %955 = vadd.xlane.f32.xlu0 %v929
  %v956 = vpop.xlane.xlu0 %955
  %957 = vadd.xlane.f32.xlu0 %v930
  %v958 = vpop.xlane.xlu0 %957
  %959 = vadd.xlane.f32.xlu0 %v931
  %v960 = vpop.xlane.xlu0 %959
  %961 = vadd.xlane.f32.xlu0 %v932
  %v962 = vpop.xlane.xlu0 %961
  %963 = vadd.xlane.f32.xlu0 %v933
  %v964 = vpop.xlane.xlu0 %963
  %965 = vadd.xlane.f32.xlu0 %v934
  %v966 = vpop.xlane.xlu0 %965
  %v967 = vadd.f32 %v903, %v936
  %v968 = vadd.f32 %v904, %v938
  %v969 = vadd.f32 %v905, %v940
  %v970 = vadd.f32 %v906, %v942
  %v971 = vadd.f32 %v907, %v944
  %v972 = vadd.f32 %v908, %v946
  %v973 = vadd.f32 %v909, %v948
  %v974 = vadd.f32 %v910, %v950
  %v975 = vadd.f32 %v911, %v952
  %v976 = vadd.f32 %v912, %v954
  %v977 = vadd.f32 %v913, %v956
  %v978 = vadd.f32 %v914, %v958
  %v979 = vadd.f32 %v915, %v960
  %v980 = vadd.f32 %v916, %v962
  %v981 = vadd.f32 %v917, %v964
  %v982 = vadd.f32 %v918, %v966
  %983 = vst.msk [vmem:[#allocation4] sm:$0xff] %vm737, %v967
  %984 = vst.msk [vmem:[#allocation4 + $0x8] sm:$0xff] %vm737, %v968
  %985 = vst.msk [vmem:[#allocation4 + $0x10] sm:$0xff] %vm737, %v969
  %986 = vst.msk [vmem:[#allocation4 + $0x18] sm:$0xff] %vm737, %v970
  %987 = vst.msk [vmem:[#allocation4 + $0x20] sm:$0xff] %vm737, %v971
  %988 = vst.msk [vmem:[#allocation4 + $0x28] sm:$0xff] %vm737, %v972
  %989 = vst.msk [vmem:[#allocation4 + $0x30] sm:$0xff] %vm737, %v973
  %990 = vst.msk [vmem:[#allocation4 + $0x38] sm:$0xff] %vm737, %v974
  %991 = vst.msk [vmem:[#allocation4 + $0x40] sm:$0xff] %vm737, %v975
  %992 = vst.msk [vmem:[#allocation4 + $0x48] sm:$0xff] %vm737, %v976
  %993 = vst.msk [vmem:[#allocation4 + $0x50] sm:$0xff] %vm737, %v977
  %994 = vst.msk [vmem:[#allocation4 + $0x58] sm:$0xff] %vm737, %v978
  %995 = vst.msk [vmem:[#allocation4 + $0x60] sm:$0xff] %vm737, %v979
  %996 = vst.msk [vmem:[#allocation4 + $0x68] sm:$0xff] %vm737, %v980
  %997 = vst.msk [vmem:[#allocation4 + $0x70] sm:$0xff] %vm737, %v981
  %998 = vst.msk [vmem:[#allocation4 + $0x78] sm:$0xff] %vm737, %v982
  %v999 = vld [vmem:[#allocation5] sm:$0xff]
  %v1000 = vld [vmem:[#allocation5 + $0x8] sm:$0xff]
  %v1001 = vld [vmem:[#allocation5 + $0x10] sm:$0xff]
  %v1002 = vld [vmem:[#allocation5 + $0x18] sm:$0xff]
  %v1003 = vld [vmem:[#allocation5 + $0x20] sm:$0xff]
  %v1004 = vld [vmem:[#allocation5 + $0x28] sm:$0xff]
  %v1005 = vld [vmem:[#allocation5 + $0x30] sm:$0xff]
  %v1006 = vld [vmem:[#allocation5 + $0x38] sm:$0xff]
  %v1007 = vld [vmem:[#allocation5 + $0x40] sm:$0xff]
  %v1008 = vld [vmem:[#allocation5 + $0x48] sm:$0xff]
  %v1009 = vld [vmem:[#allocation5 + $0x50] sm:$0xff]
  %v1010 = vld [vmem:[#allocation5 + $0x58] sm:$0xff]
  %v1011 = vld [vmem:[#allocation5 + $0x60] sm:$0xff]
  %v1012 = vld [vmem:[#allocation5 + $0x68] sm:$0xff]
  %v1013 = vld [vmem:[#allocation5 + $0x70] sm:$0xff]
  %v1014 = vld [vmem:[#allocation5 + $0x78] sm:$0xff]
  %1015 = vadd.xlane.f32.xlu0 %v887
  %v1016 = vpop.xlane.xlu0 %1015
  %1017 = vadd.xlane.f32.xlu0 %v888
  %v1018 = vpop.xlane.xlu0 %1017
  %1019 = vadd.xlane.f32.xlu0 %v889
  %v1020 = vpop.xlane.xlu0 %1019
  %1021 = vadd.xlane.f32.xlu0 %v890
  %v1022 = vpop.xlane.xlu0 %1021
  %1023 = vadd.xlane.f32.xlu0 %v891
  %v1024 = vpop.xlane.xlu0 %1023
  %1025 = vadd.xlane.f32.xlu0 %v892
  %v1026 = vpop.xlane.xlu0 %1025
  %1027 = vadd.xlane.f32.xlu0 %v893
  %v1028 = vpop.xlane.xlu0 %1027
  %1029 = vadd.xlane.f32.xlu0 %v894
  %v1030 = vpop.xlane.xlu0 %1029
  %1031 = vadd.xlane.f32.xlu0 %v895
  %v1032 = vpop.xlane.xlu0 %1031
  %1033 = vadd.xlane.f32.xlu0 %v896
  %v1034 = vpop.xlane.xlu0 %1033
  %1035 = vadd.xlane.f32.xlu0 %v897
  %v1036 = vpop.xlane.xlu0 %1035
  %1037 = vadd.xlane.f32.xlu0 %v898
  %v1038 = vpop.xlane.xlu0 %1037
  %1039 = vadd.xlane.f32.xlu0 %v899
  %v1040 = vpop.xlane.xlu0 %1039
  %1041 = vadd.xlane.f32.xlu0 %v900
  %v1042 = vpop.xlane.xlu0 %1041
  %1043 = vadd.xlane.f32.xlu0 %v901
  %v1044 = vpop.xlane.xlu0 %1043
  %1045 = vadd.xlane.f32.xlu0 %v902
  %v1046 = vpop.xlane.xlu0 %1045
  %v1047 = vadd.f32 %v999, %v1016
  %v1048 = vadd.f32 %v1000, %v1018
  %v1049 = vadd.f32 %v1001, %v1020
  %v1050 = vadd.f32 %v1002, %v1022
  %v1051 = vadd.f32 %v1003, %v1024
  %v1052 = vadd.f32 %v1004, %v1026
  %v1053 = vadd.f32 %v1005, %v1028
  %v1054 = vadd.f32 %v1006, %v1030
  %v1055 = vadd.f32 %v1007, %v1032
  %v1056 = vadd.f32 %v1008, %v1034
  %v1057 = vadd.f32 %v1009, %v1036
  %v1058 = vadd.f32 %v1010, %v1038
  %v1059 = vadd.f32 %v1011, %v1040
  %v1060 = vadd.f32 %v1012, %v1042
  %v1061 = vadd.f32 %v1013, %v1044
  %v1062 = vadd.f32 %v1014, %v1046
  %1063 = vst.msk [vmem:[#allocation5] sm:$0xff] %vm737, %v1047
  %1064 = vst.msk [vmem:[#allocation5 + $0x8] sm:$0xff] %vm737, %v1048
  %1065 = vst.msk [vmem:[#allocation5 + $0x10] sm:$0xff] %vm737, %v1049
  %1066 = vst.msk [vmem:[#allocation5 + $0x18] sm:$0xff] %vm737, %v1050
  %1067 = vst.msk [vmem:[#allocation5 + $0x20] sm:$0xff] %vm737, %v1051
  %1068 = vst.msk [vmem:[#allocation5 + $0x28] sm:$0xff] %vm737, %v1052
  %1069 = vst.msk [vmem:[#allocation5 + $0x30] sm:$0xff] %vm737, %v1053
  %1070 = vst.msk [vmem:[#allocation5 + $0x38] sm:$0xff] %vm737, %v1054
  %1071 = vst.msk [vmem:[#allocation5 + $0x40] sm:$0xff] %vm737, %v1055
  %1072 = vst.msk [vmem:[#allocation5 + $0x48] sm:$0xff] %vm737, %v1056
  %1073 = vst.msk [vmem:[#allocation5 + $0x50] sm:$0xff] %vm737, %v1057
  %1074 = vst.msk [vmem:[#allocation5 + $0x58] sm:$0xff] %vm737, %v1058
  %1075 = vst.msk [vmem:[#allocation5 + $0x60] sm:$0xff] %vm737, %v1059
  %1076 = vst.msk [vmem:[#allocation5 + $0x68] sm:$0xff] %vm737, %v1060
  %1077 = vst.msk [vmem:[#allocation5 + $0x70] sm:$0xff] %vm737, %v1061
  %1078 = vst.msk [vmem:[#allocation5 + $0x78] sm:$0xff] %vm737, %v1062
  // Predicated region
  $region22: #{tpu_custom_call.1} parent=0 // pred_check
    %p1079 = pneg %p18
  $region23: #{tpu_custom_call.1} parent=0 // pred_check_branch
    %1081 = sbr.rel (%p1079) target = $region25
  $region24: #{tpu_custom_call.1} parent=0 // pred_region
    %v1082 = vld [vmem:[#allocation2] sm:$0xff]
    %v1083 = vld [vmem:[#allocation2 + $0x8] sm:$0xff]
    %v1084 = vld [vmem:[#allocation2 + $0x10] sm:$0xff]
    %v1085 = vld [vmem:[#allocation2 + $0x18] sm:$0xff]
    %v1086 = vld [vmem:[#allocation2 + $0x20] sm:$0xff]
    %v1087 = vld [vmem:[#allocation2 + $0x28] sm:$0xff]
    %v1088 = vld [vmem:[#allocation2 + $0x30] sm:$0xff]
    %v1089 = vld [vmem:[#allocation2 + $0x38] sm:$0xff]
    %v1090 = vld [vmem:[#allocation2 + $0x40] sm:$0xff]
    %v1091 = vld [vmem:[#allocation2 + $0x48] sm:$0xff]
    %v1092 = vld [vmem:[#allocation2 + $0x50] sm:$0xff]
    %v1093 = vld [vmem:[#allocation2 + $0x58] sm:$0xff]
    %v1094 = vld [vmem:[#allocation2 + $0x60] sm:$0xff]
    %v1095 = vld [vmem:[#allocation2 + $0x68] sm:$0xff]
    %v1096 = vld [vmem:[#allocation2 + $0x70] sm:$0xff]
    %v1097 = vld [vmem:[#allocation2 + $0x78] sm:$0xff]
    %v1098 = vld [vmem:[#allocation3] sm:$0xff]
    %v1099 = vld [vmem:[#allocation3 + $0x8] sm:$0xff]
    %v1100 = vld [vmem:[#allocation3 + $0x10] sm:$0xff]
    %v1101 = vld [vmem:[#allocation3 + $0x18] sm:$0xff]
    %v1102 = vld [vmem:[#allocation3 + $0x20] sm:$0xff]
    %v1103 = vld [vmem:[#allocation3 + $0x28] sm:$0xff]
    %v1104 = vld [vmem:[#allocation3 + $0x30] sm:$0xff]
    %v1105 = vld [vmem:[#allocation3 + $0x38] sm:$0xff]
    %v1106 = vld [vmem:[#allocation3 + $0x40] sm:$0xff]
    %v1107 = vld [vmem:[#allocation3 + $0x48] sm:$0xff]
    %v1108 = vld [vmem:[#allocation3 + $0x50] sm:$0xff]
    %v1109 = vld [vmem:[#allocation3 + $0x58] sm:$0xff]
    %v1110 = vld [vmem:[#allocation3 + $0x60] sm:$0xff]
    %v1111 = vld [vmem:[#allocation3 + $0x68] sm:$0xff]
    %v1112 = vld [vmem:[#allocation3 + $0x70] sm:$0xff]
    %v1113 = vld [vmem:[#allocation3 + $0x78] sm:$0xff]
    %v1114 = vlog2.pop %v1098
    %v1115 = vmul.f32 %v1114, 0.6931472
    %v1116 = vlog2.pop %v1099
    %v1117 = vmul.f32 %v1116, 0.6931472
    %v1118 = vlog2.pop %v1100
    %v1119 = vmul.f32 %v1118, 0.6931472
    %v1120 = vlog2.pop %v1101
    %v1121 = vmul.f32 %v1120, 0.6931472
    %v1122 = vlog2.pop %v1102
    %v1123 = vmul.f32 %v1122, 0.6931472
    %v1124 = vlog2.pop %v1103
    %v1125 = vmul.f32 %v1124, 0.6931472
    %v1126 = vlog2.pop %v1104
    %v1127 = vmul.f32 %v1126, 0.6931472
    %v1128 = vlog2.pop %v1105
    %v1129 = vmul.f32 %v1128, 0.6931472
    %v1130 = vlog2.pop %v1106
    %v1131 = vmul.f32 %v1130, 0.6931472
    %v1132 = vlog2.pop %v1107
    %v1133 = vmul.f32 %v1132, 0.6931472
    %v1134 = vlog2.pop %v1108
    %v1135 = vmul.f32 %v1134, 0.6931472
    %v1136 = vlog2.pop %v1109
    %v1137 = vmul.f32 %v1136, 0.6931472
    %v1138 = vlog2.pop %v1110
    %v1139 = vmul.f32 %v1138, 0.6931472
    %v1140 = vlog2.pop %v1111
    %v1141 = vmul.f32 %v1140, 0.6931472
    %v1142 = vlog2.pop %v1112
    %v1143 = vmul.f32 %v1142, 0.6931472
    %v1144 = vlog2.pop %v1113
    %v1145 = vmul.f32 %v1144, 0.6931472
    %v1146 = vadd.f32 %v1082, %v1115
    %v1147 = vadd.f32 %v1083, %v1117
    %v1148 = vadd.f32 %v1084, %v1119
    %v1149 = vadd.f32 %v1085, %v1121
    %v1150 = vadd.f32 %v1086, %v1123
    %v1151 = vadd.f32 %v1087, %v1125
    %v1152 = vadd.f32 %v1088, %v1127
    %v1153 = vadd.f32 %v1089, %v1129
    %v1154 = vadd.f32 %v1090, %v1131
    %v1155 = vadd.f32 %v1091, %v1133
    %v1156 = vadd.f32 %v1092, %v1135
    %v1157 = vadd.f32 %v1093, %v1137
    %v1158 = vadd.f32 %v1094, %v1139
    %v1159 = vadd.f32 %v1095, %v1141
    %v1160 = vadd.f32 %v1096, %v1143
    %v1161 = vadd.f32 %v1097, %v1145
    %v1162 = vld [vmem:[#allocation5] sm:$0xff]
    %v1163 = vld [vmem:[#allocation5 + $0x8] sm:$0xff]
    %v1164 = vld [vmem:[#allocation5 + $0x10] sm:$0xff]
    %v1165 = vld [vmem:[#allocation5 + $0x18] sm:$0xff]
    %v1166 = vld [vmem:[#allocation5 + $0x20] sm:$0xff]
    %v1167 = vld [vmem:[#allocation5 + $0x28] sm:$0xff]
    %v1168 = vld [vmem:[#allocation5 + $0x30] sm:$0xff]
    %v1169 = vld [vmem:[#allocation5 + $0x38] sm:$0xff]
    %v1170 = vld [vmem:[#allocation5 + $0x40] sm:$0xff]
    %v1171 = vld [vmem:[#allocation5 + $0x48] sm:$0xff]
    %v1172 = vld [vmem:[#allocation5 + $0x50] sm:$0xff]
    %v1173 = vld [vmem:[#allocation5 + $0x58] sm:$0xff]
    %v1174 = vld [vmem:[#allocation5 + $0x60] sm:$0xff]
    %v1175 = vld [vmem:[#allocation5 + $0x68] sm:$0xff]
    %v1176 = vld [vmem:[#allocation5 + $0x70] sm:$0xff]
    %v1177 = vld [vmem:[#allocation5 + $0x78] sm:$0xff]
    %vm1178 = vcmp.lt.f32.partialorder %v1162, 1e-06
    %vm1179 = vcmp.lt.f32.partialorder %v1163, 1e-06
    %vm1180 = vcmp.lt.f32.partialorder %v1164, 1e-06
    %vm1181 = vcmp.lt.f32.partialorder %v1165, 1e-06
    %vm1182 = vcmp.lt.f32.partialorder %v1166, 1e-06
    %vm1183 = vcmp.lt.f32.partialorder %v1167, 1e-06
    %vm1184 = vcmp.lt.f32.partialorder %v1168, 1e-06
    %vm1185 = vcmp.lt.f32.partialorder %v1169, 1e-06
    %vm1186 = vcmp.lt.f32.partialorder %v1170, 1e-06
    %vm1187 = vcmp.lt.f32.partialorder %v1171, 1e-06
    %vm1188 = vcmp.lt.f32.partialorder %v1172, 1e-06
    %vm1189 = vcmp.lt.f32.partialorder %v1173, 1e-06
    %vm1190 = vcmp.lt.f32.partialorder %v1174, 1e-06
    %vm1191 = vcmp.lt.f32.partialorder %v1175, 1e-06
    %vm1192 = vcmp.lt.f32.partialorder %v1176, 1e-06
    %vm1193 = vcmp.lt.f32.partialorder %v1177, 1e-06
    %v1194 = vsel %vm1178, 1.0, %v1162
    %v1195 = vsel %vm1179, 1.0, %v1163
    %v1196 = vsel %vm1180, 1.0, %v1164
    %v1197 = vsel %vm1181, 1.0, %v1165
    %v1198 = vsel %vm1182, 1.0, %v1166
    %v1199 = vsel %vm1183, 1.0, %v1167
    %v1200 = vsel %vm1184, 1.0, %v1168
    %v1201 = vsel %vm1185, 1.0, %v1169
    %v1202 = vsel %vm1186, 1.0, %v1170
    %v1203 = vsel %vm1187, 1.0, %v1171
    %v1204 = vsel %vm1188, 1.0, %v1172
    %v1205 = vsel %vm1189, 1.0, %v1173
    %v1206 = vsel %vm1190, 1.0, %v1174
    %v1207 = vsel %vm1191, 1.0, %v1175
    %v1208 = vsel %vm1192, 1.0, %v1176
    %v1209 = vsel %vm1193, 1.0, %v1177
    %v1210 = vld [vmem:[#allocation4] sm:$0xff]
    %v1211 = vld [vmem:[#allocation4 + $0x8] sm:$0xff]
    %v1212 = vld [vmem:[#allocation4 + $0x10] sm:$0xff]
    %v1213 = vld [vmem:[#allocation4 + $0x18] sm:$0xff]
    %v1214 = vld [vmem:[#allocation4 + $0x20] sm:$0xff]
    %v1215 = vld [vmem:[#allocation4 + $0x28] sm:$0xff]
    %v1216 = vld [vmem:[#allocation4 + $0x30] sm:$0xff]
    %v1217 = vld [vmem:[#allocation4 + $0x38] sm:$0xff]
    %v1218 = vld [vmem:[#allocation4 + $0x40] sm:$0xff]
    %v1219 = vld [vmem:[#allocation4 + $0x48] sm:$0xff]
    %v1220 = vld [vmem:[#allocation4 + $0x50] sm:$0xff]
    %v1221 = vld [vmem:[#allocation4 + $0x58] sm:$0xff]
    %v1222 = vld [vmem:[#allocation4 + $0x60] sm:$0xff]
    %v1223 = vld [vmem:[#allocation4 + $0x68] sm:$0xff]
    %v1224 = vld [vmem:[#allocation4 + $0x70] sm:$0xff]
    %v1225 = vld [vmem:[#allocation4 + $0x78] sm:$0xff]
    %v1226 = vmul.f32 %v1162, %v1146
    %v1227 = vmul.f32 %v1163, %v1147
    %v1228 = vmul.f32 %v1164, %v1148
    %v1229 = vmul.f32 %v1165, %v1149
    %v1230 = vmul.f32 %v1166, %v1150
    %v1231 = vmul.f32 %v1167, %v1151
    %v1232 = vmul.f32 %v1168, %v1152
    %v1233 = vmul.f32 %v1169, %v1153
    %v1234 = vmul.f32 %v1170, %v1154
    %v1235 = vmul.f32 %v1171, %v1155
    %v1236 = vmul.f32 %v1172, %v1156
    %v1237 = vmul.f32 %v1173, %v1157
    %v1238 = vmul.f32 %v1174, %v1158
    %v1239 = vmul.f32 %v1175, %v1159
    %v1240 = vmul.f32 %v1176, %v1160
    %v1241 = vmul.f32 %v1177, %v1161
    %v1242 = vsub.f32 %v1210, %v1226
    %v1243 = vsub.f32 %v1211, %v1227
    %v1244 = vsub.f32 %v1212, %v1228
    %v1245 = vsub.f32 %v1213, %v1229
    %v1246 = vsub.f32 %v1214, %v1230
    %v1247 = vsub.f32 %v1215, %v1231
    %v1248 = vsub.f32 %v1216, %v1232
    %v1249 = vsub.f32 %v1217, %v1233
    %v1250 = vsub.f32 %v1218, %v1234
    %v1251 = vsub.f32 %v1219, %v1235
    %v1252 = vsub.f32 %v1220, %v1236
    %v1253 = vsub.f32 %v1221, %v1237
    %v1254 = vsub.f32 %v1222, %v1238
    %v1255 = vsub.f32 %v1223, %v1239
    %v1256 = vsub.f32 %v1224, %v1240
    %v1257 = vsub.f32 %v1225, %v1241
    %v1258 = vrcp.pop %v1194
    %v1259 = vmul.f32 %v1242, %v1258
    %v1260 = vrcp.pop %v1195
    %v1261 = vmul.f32 %v1243, %v1260
    %v1262 = vrcp.pop %v1196
    %v1263 = vmul.f32 %v1244, %v1262
    %v1264 = vrcp.pop %v1197
    %v1265 = vmul.f32 %v1245, %v1264
    %v1266 = vrcp.pop %v1198
    %v1267 = vmul.f32 %v1246, %v1266
    %v1268 = vrcp.pop %v1199
    %v1269 = vmul.f32 %v1247, %v1268
    %v1270 = vrcp.pop %v1200
    %v1271 = vmul.f32 %v1248, %v1270
    %v1272 = vrcp.pop %v1201
    %v1273 = vmul.f32 %v1249, %v1272
    %v1274 = vrcp.pop %v1202
    %v1275 = vmul.f32 %v1250, %v1274
    %v1276 = vrcp.pop %v1203
    %v1277 = vmul.f32 %v1251, %v1276
    %v1278 = vrcp.pop %v1204
    %v1279 = vmul.f32 %v1252, %v1278
    %v1280 = vrcp.pop %v1205
    %v1281 = vmul.f32 %v1253, %v1280
    %v1282 = vrcp.pop %v1206
    %v1283 = vmul.f32 %v1254, %v1282
    %v1284 = vrcp.pop %v1207
    %v1285 = vmul.f32 %v1255, %v1284
    %v1286 = vrcp.pop %v1208
    %v1287 = vmul.f32 %v1256, %v1286
    %v1288 = vrcp.pop %v1209
    %v1289 = vmul.f32 %v1257, %v1288
    %vm1290 = vcmp.lt.s32.totalorder %v347, 16
    %vm1291 = vcmp.lt.s32.totalorder %v348, 16
    %vm1292 = vcmp.lt.s32.totalorder %v349, 16
    %vm1293 = vcmp.lt.s32.totalorder %v350, 16
    %vm1294 = vcmp.lt.s32.totalorder %v351, 16
    %vm1295 = vcmp.lt.s32.totalorder %v352, 16
    %vm1296 = vcmp.lt.s32.totalorder %v353, 16
    %vm1297 = vcmp.lt.s32.totalorder %v354, 16
    %vm1298 = vcmp.lt.s32.totalorder %v355, 16
    %vm1299 = vcmp.lt.s32.totalorder %v356, 16
    %vm1300 = vcmp.lt.s32.totalorder %v357, 16
    %vm1301 = vcmp.lt.s32.totalorder %v358, 16
    %vm1302 = vcmp.lt.s32.totalorder %v359, 16
    %vm1303 = vcmp.lt.s32.totalorder %v360, 16
    %vm1304 = vcmp.lt.s32.totalorder %v361, 16
    %vm1305 = vcmp.lt.s32.totalorder %v362, 16
    %v1306 = vmul.f32 %v1259, -1.0
    %v1307 = vmul.f32 %v1261, -1.0
    %v1308 = vmul.f32 %v1263, -1.0
    %v1309 = vmul.f32 %v1265, -1.0
    %v1310 = vmul.f32 %v1267, -1.0
    %v1311 = vmul.f32 %v1269, -1.0
    %v1312 = vmul.f32 %v1271, -1.0
    %v1313 = vmul.f32 %v1273, -1.0
    %v1314 = vmul.f32 %v1275, -1.0
    %v1315 = vmul.f32 %v1277, -1.0
    %v1316 = vmul.f32 %v1279, -1.0
    %v1317 = vmul.f32 %v1281, -1.0
    %v1318 = vmul.f32 %v1283, -1.0
    %v1319 = vmul.f32 %v1285, -1.0
    %v1320 = vmul.f32 %v1287, -1.0
    %v1321 = vmul.f32 %v1289, -1.0
    %v1322 = vsel %vm1290, %v1306, 0.0
    %v1323 = vsel %vm1291, %v1307, 0.0
    %v1324 = vsel %vm1292, %v1308, 0.0
    %v1325 = vsel %vm1293, %v1309, 0.0
    %v1326 = vsel %vm1294, %v1310, 0.0
    %v1327 = vsel %vm1295, %v1311, 0.0
    %v1328 = vsel %vm1296, %v1312, 0.0
    %v1329 = vsel %vm1297, %v1313, 0.0
    %v1330 = vsel %vm1298, %v1314, 0.0
    %v1331 = vsel %vm1299, %v1315, 0.0
    %v1332 = vsel %vm1300, %v1316, 0.0
    %v1333 = vsel %vm1301, %v1317, 0.0
    %v1334 = vsel %vm1302, %v1318, 0.0
    %v1335 = vsel %vm1303, %v1319, 0.0
    %v1336 = vsel %vm1304, %v1320, 0.0
    %v1337 = vsel %vm1305, %v1321, 0.0
    %1338 = vst.msk [vmem:[%s4] sm:$0xff] %vm737, %v1322
    %1339 = vst.msk [vmem:[%s4 + $0x8] sm:$0xff] %vm737, %v1323
    %1340 = vst.msk [vmem:[%s4 + $0x10] sm:$0xff] %vm737, %v1324
    %1341 = vst.msk [vmem:[%s4 + $0x18] sm:$0xff] %vm737, %v1325
    %1342 = vst.msk [vmem:[%s4 + $0x20] sm:$0xff] %vm737, %v1326
    %1343 = vst.msk [vmem:[%s4 + $0x28] sm:$0xff] %vm737, %v1327
    %1344 = vst.msk [vmem:[%s4 + $0x30] sm:$0xff] %vm737, %v1328
    %1345 = vst.msk [vmem:[%s4 + $0x38] sm:$0xff] %vm737, %v1329
    %1346 = vst.msk [vmem:[%s4 + $0x40] sm:$0xff] %vm737, %v1330
    %1347 = vst.msk [vmem:[%s4 + $0x48] sm:$0xff] %vm737, %v1331
    %1348 = vst.msk [vmem:[%s4 + $0x50] sm:$0xff] %vm737, %v1332
    %1349 = vst.msk [vmem:[%s4 + $0x58] sm:$0xff] %vm737, %v1333
    %1350 = vst.msk [vmem:[%s4 + $0x60] sm:$0xff] %vm737, %v1334
    %1351 = vst.msk [vmem:[%s4 + $0x68] sm:$0xff] %vm737, %v1335
    %1352 = vst.msk [vmem:[%s4 + $0x70] sm:$0xff] %vm737, %v1336
    %1353 = vst.msk [vmem:[%s4 + $0x78] sm:$0xff] %vm737, %v1337
  $region25: #{tpu_custom_call.1} parent=0 // pred_fallthru
    _
  // Predicated region
  $region26: #{tpu_custom_call.1} parent=0 // pred_check
    _
  $region27: #{tpu_custom_call.1} parent=0 // pred_check_branch
    %1355 = sbr.rel (0) target = $region29
  $region28: #{tpu_custom_call.1} parent=0 // pred_region
    _
  $region29: #{tpu_custom_call.1} parent=0 // pred_fallthru
    _
  // Predicated region
  $region30: #{tpu_custom_call.1} parent=0 // pred_check
    _
  $region31: #{tpu_custom_call.1} parent=0 // pred_check_branch
    %1357 = sbr.rel (0) target = $region33
  $region32: #{tpu_custom_call.1} parent=0 // pred_region
    _
  $region33: #{tpu_custom_call.1} parent=0 // pred_fallthru
    _

</llo_original>
